<compile_context>
chip_gen: v7x
topology: tpu7x:2x2x1
jax: 0.10.0
libtpu: 0.0.40
codegen_flags: <defaults>
</compile_context>

<pallas_src>
import functools

import jax
import jax.numpy as jnp
from jax import lax
from jax.experimental import pallas as pl
from jax.experimental.pallas import tpu as pltpu

EMB_DIM = 64
ROW_PAD = 256                    # table-row padding: MXU contraction tile
ONE_HOT_MAX_ROWS = 4096          # above this, one-hot transients get too big
VMEM_BUDGET = 48 * 1024 * 1024   # conservative for v7x (64 MiB per TensorCore)


def _round_up(x, m):
    return (x + m - 1) // m * m


def _vmem_tile_bytes(rows, cols, dtype):
    """VMEM footprint of a (rows, cols) array including (8,128) tile padding."""
    itemsize = jnp.dtype(dtype).itemsize
    sub = max(8, 32 // itemsize)  # f32: 8 sublanes, bf16: 16, int8: 32
    return _round_up(rows, sub) * _round_up(cols, 128) * itemsize


# ---------------------------------------------------------------------------
# Kernels
# ---------------------------------------------------------------------------

def _mf_onehot_kernel(users_ref, items_ref,   # (TB, 1) int32 index columns (VMEM)
                      uemb_ref, iemb_ref,     # full (row-padded) tables, resident
                      out_ref,                # (TB, 1) f32
                      *, tb):
    nu = uemb_ref.shape[0]
    ni = iemb_ref.shape[0]
    # 0/1 one-hot values are exact in bf16, so match bf16 tables (halves the
    # one-hot VMEM traffic); otherwise stay in f32.
    both_bf16 = (uemb_ref.dtype == jnp.bfloat16) and (iemb_ref.dtype == jnp.bfloat16)
    cdt = jnp.bfloat16 if both_bf16 else jnp.float32

    u_idx = users_ref[...]                    # (TB, 1) int32
    i_idx = items_ref[...]

    oh_u = (u_idx == lax.broadcasted_iota(jnp.int32, (tb, nu), 1)).astype(cdt)
    oh_i = (i_idx == lax.broadcasted_iota(jnp.int32, (tb, ni), 1)).astype(cdt)

    # Row gather on the MXU: (TB, rows) @ (rows, 64) -> (TB, 64), f32 accum.
    u_rows = jnp.dot(oh_u, uemb_ref[...].astype(cdt),
                     preferred_element_type=jnp.float32)
    i_rows = jnp.dot(oh_i, iemb_ref[...].astype(cdt),
                     preferred_element_type=jnp.float32)

    # Elementwise product (VPU) + in-row reduce (XLU). keepdims keeps the
    # result sublane-major -> no cross-lane relayout before the store.
    out_ref[...] = jnp.sum(u_rows * i_rows, axis=-1, keepdims=True)


def _mf_loop_kernel(users_sm, items_sm,       # scalar-prefetched indices (SMEM)
                    uemb_ref, iemb_ref,       # full (row-padded) tables, resident
                    out_ref,                  # (TB, 1) f32
                    u_rows, i_rows,           # (TB, 64) gather scratch
                    *, tb):
    base = pl.program_id(0) * tb

    def gather_one(r, carry):
        u = users_sm[base + r]                # SMEM scalar reads
        i = items_sm[base + r]
        u_rows[pl.ds(r, 1), :] = uemb_ref[pl.ds(u, 1), :]
        i_rows[pl.ds(r, 1), :] = iemb_ref[pl.ds(i, 1), :]
        return carry

    lax.fori_loop(0, tb, gather_one, 0, unroll=8)

    prod = u_rows[...].astype(jnp.float32) * i_rows[...].astype(jnp.float32)
    out_ref[...] = jnp.sum(prod, axis=-1, keepdims=True)


# ---------------------------------------------------------------------------
# Wrapper
# ---------------------------------------------------------------------------

def mf_forward(user_emb, item_emb, users, items, *, tb=512, gather_mode="auto"):
    """gamma[b] = sum_d user_emb[users[b], d] * item_emb[items[b], d]"""
    assert user_emb.shape[1] == EMB_DIM and item_emb.shape[1] == EMB_DIM
    assert tb % 8 == 0
    users = users.astype(jnp.int32)
    items = items.astype(jnp.int32)
    b = users.shape[0]

    # ---- batch tiling / padding -------------------------------------------
    num_tiles = pl.cdiv(b, tb)
    b_pad = num_tiles * tb
    if b_pad != b:
        users = jnp.pad(users, (0, b_pad - b))   # pad with row 0 (sliced off below)
        items = jnp.pad(items, (0, b_pad - b))

    # ---- table padding (MXU-friendly contraction dim) ----------------------
    def pad_rows(t):
        rp = _round_up(t.shape[0], ROW_PAD)
        return jnp.pad(t, ((0, rp - t.shape[0]), (0, 0))) if rp != t.shape[0] else t

    uemb_p = pad_rows(user_emb)
    iemb_p = pad_rows(item_emb)
    nu_pad, ni_pad = uemb_p.shape[0], iemb_p.shape[0]
    tdt = uemb_p.dtype

    if gather_mode == "auto":
        use_onehot = max(nu_pad, ni_pad) <= ONE_HOT_MAX_ROWS
    else:
        use_onehot = gather_mode == "onehot"

    # ---- VMEM budget (counts (8,128) tile padding and buffer counts) -------
    cdt = jnp.bfloat16 if tdt == jnp.bfloat16 else jnp.float32
    needed = (
        _vmem_tile_bytes(nu_pad, EMB_DIM, tdt)          # user table, 1 buffer
        + _vmem_tile_bytes(ni_pad, EMB_DIM, tdt)        # item table, 1 buffer
        + 2 * _vmem_tile_bytes(tb, 1, jnp.float32)      # output, 2 buffers
    )
    if use_onehot:
        needed += 2 * 2 * _vmem_tile_bytes(tb, 1, jnp.int32)       # index cols, 2 bufs
        needed += _vmem_tile_bytes(tb, nu_pad, cdt)                # one-hot transients
        needed += _vmem_tile_bytes(tb, ni_pad, cdt)
        needed += 3 * _vmem_tile_bytes(tb, EMB_DIM, jnp.float32)   # u_rows/i_rows/prod
    else:
        needed += 2 * _vmem_tile_bytes(tb, EMB_DIM, tdt)           # gather scratch
        needed += _vmem_tile_bytes(tb, EMB_DIM, jnp.float32)       # prod
    needed += 4 * 1024 * 1024                                      # compiler margin

    # TODO(synk): for tables above this budget, add an HBM (pl.ANY) + manual
    # double-buffered DMA row-gather path instead of VMEM residency.
    assert needed <= VMEM_BUDGET, f"tables too large for VMEM-resident path ({needed} B)"
    # Always set the scoped-VMEM limit (v5e default is only 16 MiB); never
    # below the 32 MiB v6e/v7x default so the estimate can't under-constrain.
    vmem_limit = int(max(needed, 32 * 1024 * 1024))

    # Megacore sharding only when each core gets >=2 tiles; a tiny grid would
    # just duplicate the full-table DMA/residency per v7x TensorCore.
    dim_sem = ("parallel",) if num_tiles >= 4 else ("arbitrary",)

    elem = jnp.dtype(tdt).itemsize
    flops = 2 * b_pad * EMB_DIM
    if use_onehot:
        flops += 2 * b_pad * (nu_pad + ni_pad) * EMB_DIM
    cost = pl.CostEstimate(
        flops=int(flops), transcendentals=0,
        bytes_accessed=int((nu_pad + ni_pad) * EMB_DIM * elem     # table HBM->VMEM
                           + 2 * b_pad * 4                        # index vectors
                           + b_pad * 4))                          # output

    def table_spec(idx_map, rows):
        # Constant block index -> fetched once; single-buffered (no wasted copy).
        return pl.BlockSpec((rows, EMB_DIM), idx_map, pipeline_mode=pl.Buffered(1))

    out_shape = jax.ShapeDtypeStruct((b_pad, 1), jnp.float32)

    if use_onehot:
        grid_spec = pltpu.PrefetchScalarGridSpec(
            num_scalar_prefetch=0,
            grid=(num_tiles,),
            in_specs=[
                pl.BlockSpec((tb, 1), lambda t: (t, 0)),       # users column
                pl.BlockSpec((tb, 1), lambda t: (t, 0)),       # items column
                table_spec(lambda t: (0, 0), nu_pad),
                table_spec(lambda t: (0, 0), ni_pad),
            ],
            out_specs=pl.BlockSpec((tb, 1), lambda t: (t, 0)),
        )
        kernel = functools.partial(_mf_onehot_kernel, tb=tb)
        args = (users.reshape(b_pad, 1), items.reshape(b_pad, 1), uemb_p, iemb_p)
    else:
        grid_spec = pltpu.PrefetchScalarGridSpec(
            num_scalar_prefetch=2,                               # users, items -> SMEM
            grid=(num_tiles,),
            in_specs=[
                table_spec(lambda t, u_sm, i_sm: (0, 0), nu_pad),
                table_spec(lambda t, u_sm, i_sm: (0, 0), ni_pad),
            ],
            out_specs=pl.BlockSpec((tb, 1), lambda t, u_sm, i_sm: (t, 0)),
            scratch_shapes=[
                pltpu.VMEM((tb, EMB_DIM), tdt),
                pltpu.VMEM((tb, EMB_DIM), iemb_p.dtype),
            ],
        )
        kernel = functools.partial(_mf_loop_kernel, tb=tb)
        args = (users, items, uemb_p, iemb_p)

    out = pl.pallas_call(
        kernel,
        out_shape=out_shape,
        grid_spec=grid_spec,
        compiler_params=pltpu.CompilerParams(
            dimension_semantics=dim_sem,
            vmem_limit_bytes=vmem_limit,
        ),
        cost_estimate=cost,
    )(*args)

    return out[:b, 0]          # [B], matches torch.sum(..., dim=1)


if __name__ == "__main__":
    key = jax.random.PRNGKey(0)
    k_u, k_i, k_uid, k_iid = jax.random.split(key, 4)

    num_users = 128
    num_items = 200
    batch = 300                # not a multiple of the tile -> exercises padding path

    # nn.init.normal_(weight, std=0.1) — deterministic synthetic parameters.
    user_emb = 0.1 * jax.random.normal(k_u, (num_users, EMB_DIM), dtype=jnp.float32)
    item_emb = 0.1 * jax.random.normal(k_i, (num_items, EMB_DIM), dtype=jnp.float32)

    users = jax.random.randint(k_uid, (batch,), 0, num_users, dtype=jnp.int32)
    items = jax.random.randint(k_iid, (batch,), 0, num_items, dtype=jnp.int32)

    # Pure-JAX reference for the forward semantics.
    ref = jnp.sum(user_emb[users] * item_emb[items], axis=1)

    # Main path: one-hot MXU gather. tb=256 -> 2 grid tiles + padded tail.
    gamma = jax.block_until_ready(
        mf_forward(user_emb, item_emb, users, items, tb=256))
    assert gamma.shape == (batch,)
    # 1e-3 tolerance keeps the check robust to the MXU's f32 matmul precision mode.
    assert jnp.allclose(gamma, ref, atol=1e-3, rtol=1e-3)

    # Fallback path (scalar-gather loop, used for large VMEM-resident tables).
    gamma_loop = jax.block_until_ready(
        mf_forward(user_emb, item_emb, users, items, tb=256, gather_mode="loop"))
    assert jnp.allclose(gamma_loop, ref, atol=1e-5, rtol=1e-5)

    print("KERNEL_OK")
</pallas_src>

<mosaic_0001>
module attributes {stable_mosaic.version = 11 : i64} {
  func.func @_mf_onehot_kernel(%arg0: i32, %arg1: memref<256x1xi32, #tpu.memory_space<vmem>>, %arg2: memref<256x1xi32, #tpu.memory_space<vmem>>, %arg3: memref<256x64xf32, #tpu.memory_space<vmem>>, %arg4: memref<256x64xf32, #tpu.memory_space<vmem>>, %arg5: memref<256x1xf32, #tpu.memory_space<vmem>>) attributes {dimension_semantics = [#tpu.dimension_semantics<arbitrary>], iteration_bounds = array<i64: 2>, scalar_prefetch = 0 : i64, scratch_operands = 0 : i64, tpu.core_type = #tpu.core_type<tc>, window_params = [{transform_indices = @transform_0, window_bounds = array<i64: 256, 1>}, {transform_indices = @transform_1, window_bounds = array<i64: 256, 1>}, {pipeline_mode = #tpu.pipeline_mode<synchronous>, transform_indices = @transform_2, window_bounds = array<i64: 256, 64>}, {pipeline_mode = #tpu.pipeline_mode<synchronous>, transform_indices = @transform_3, window_bounds = array<i64: 256, 64>}, {transform_indices = @transform_4, window_bounds = array<i64: 256, 1>}]} {
    %c0 = arith.constant 0 : index
    %c0_0 = arith.constant 0 : index
    %0 = vector.load %arg1[%c0, %c0_0] : memref<256x1xi32, #tpu.memory_space<vmem>>, vector<256x1xi32>
    %c0_1 = arith.constant 0 : index
    %c0_2 = arith.constant 0 : index
    %1 = vector.load %arg2[%c0_1, %c0_2] : memref<256x1xi32, #tpu.memory_space<vmem>>, vector<256x1xi32>
    %2 = tpu.iota {dimensions = array<i32: 1>} : vector<256x256xi32>
    %3 = vector.broadcast %0 : vector<256x1xi32> to vector<256x256xi32>
    %4 = arith.cmpi eq, %3, %2 : vector<256x256xi32>
    %5 = arith.extui %4 : vector<256x256xi1> to vector<256x256xi32>
    %6 = arith.sitofp %5 : vector<256x256xi32> to vector<256x256xf32>
    %7 = tpu.iota {dimensions = array<i32: 1>} : vector<256x256xi32>
    %8 = vector.broadcast %1 : vector<256x1xi32> to vector<256x256xi32>
    %9 = arith.cmpi eq, %8, %7 : vector<256x256xi32>
    %10 = arith.extui %9 : vector<256x256xi1> to vector<256x256xi32>
    %11 = arith.sitofp %10 : vector<256x256xi32> to vector<256x256xf32>
    %c0_3 = arith.constant 0 : index
    %c0_4 = arith.constant 0 : index
    %12 = vector.load %arg3[%c0_3, %c0_4] : memref<256x64xf32, #tpu.memory_space<vmem>>, vector<256x64xf32>
    %cst = arith.constant dense<0.000000e+00> : vector<256x64xf32>
    %13 = tpu.matmul %6, %12, %cst {dimension_numbers = #tpu.dot_dimension_numbers<[1], [0], [0], [1], [0, 0, 1, 1], [], []>} : vector<256x256xf32>, vector<256x64xf32>, vector<256x64xf32> -> vector<256x64xf32>
    %c0_5 = arith.constant 0 : index
    %c0_6 = arith.constant 0 : index
    %14 = vector.load %arg4[%c0_5, %c0_6] : memref<256x64xf32, #tpu.memory_space<vmem>>, vector<256x64xf32>
    %cst_7 = arith.constant dense<0.000000e+00> : vector<256x64xf32>
    %15 = tpu.matmul %11, %14, %cst_7 {dimension_numbers = #tpu.dot_dimension_numbers<[1], [0], [0], [1], [0, 0, 1, 1], [], []>} : vector<256x256xf32>, vector<256x64xf32>, vector<256x64xf32> -> vector<256x64xf32>
    %16 = arith.mulf %13, %15 : vector<256x64xf32>
    %cst_8 = arith.constant dense<0.000000e+00> : vector<256xf32>
    %17 = vector.multi_reduction <add>, %16, %cst_8 [1] : vector<256x64xf32> to vector<256xf32>
    %18 = vector.shape_cast %17 : vector<256xf32> to vector<256x1xf32>
    %c0_9 = arith.constant 0 : index
    %c0_10 = arith.constant 0 : index
    %19 = vector.load %arg5[%c0_9, %c0_10] : memref<256x1xf32, #tpu.memory_space<vmem>>, vector<256x1xf32>
    tpu.vector_store %arg5[%c0_9, %c0_10], %18 {strides = array<i32>} : memref<256x1xf32, #tpu.memory_space<vmem>>, vector<256x1xf32>,
    return
  }
  func.func @transform_0(%arg0: i32) -> (i32, i32) {
    %c0_i32 = arith.constant 0 : i32
    %c0_i32_0 = arith.constant 0 : i32
    return %arg0, %c0_i32 : i32, i32
  }
  func.func @transform_1(%arg0: i32) -> (i32, i32) {
    %c0_i32 = arith.constant 0 : i32
    %c0_i32_0 = arith.constant 0 : i32
    return %arg0, %c0_i32 : i32, i32
  }
  func.func @transform_2(%arg0: i32) -> (i32, i32) {
    %c0_i32 = arith.constant 0 : i32
    %c0_i32_0 = arith.constant 0 : i32
    %c0_i32_1 = arith.constant 0 : i32
    return %c0_i32, %c0_i32_0 : i32, i32
  }
  func.func @transform_3(%arg0: i32) -> (i32, i32) {
    %c0_i32 = arith.constant 0 : i32
    %c0_i32_0 = arith.constant 0 : i32
    %c0_i32_1 = arith.constant 0 : i32
    return %c0_i32, %c0_i32_0 : i32, i32
  }
  func.func @transform_4(%arg0: i32) -> (i32, i32) {
    %c0_i32 = arith.constant 0 : i32
    %c0_i32_0 = arith.constant 0 : i32
    return %arg0, %c0_i32 : i32, i32
  }
}

</mosaic_0001>

<llo_original>
// kernel: tpu_custom_call.1
$region0: #{tpu_custom_call.1}
  #allocation0 [shape = 'u32[]', space=smem, size = 0x4, offset = 0x4, fixed_abs, tag = 'smem constant byte address 0x4 - core index']
  #allocation1 [shape = 'u32[144,128]{1,0:T(1,128)}', space=vmem, size = 0x12000, scoped, tag = 'internal scratch']
  %s0 = inlined_call_operand.vmem [shape: s32[512,1], index: 0, kind: input, shape index: {}]
  %s1 = inlined_call_operand.vmem [shape: s32[512,1], index: 1, kind: input, shape index: {}]
  %s2 = inlined_call_operand.vmem [shape: f32[256,64], index: 2, kind: input, shape index: {}]
  %s3 = inlined_call_operand.vmem [shape: f32[256,64], index: 3, kind: input, shape index: {}]
  %s4 = inlined_call_operand.vmem [shape: f32[512,1], index: 4, kind: output, shape index: {}]
  %s5 = sld [smem:[#allocation0]]
  $region49: #{tpu_custom_call.1} parent=0
    _
  %s7 = ssub.s32 1, %s5
  %s8 = scalar_select 0, %s7, %s5
  loop: start=0, step=1, limit=4
  $region2: #{tpu_custom_call.1} parent=0 // loop_pre_header
    _
  $region3: #{tpu_custom_call.1} parent=0 // loop_header
    %s10 = sphi 0, %s14
    %p11 = scmp.ge.s32.totalorder %s10, 4
    %s20 = sphi 0, %s22
    %s23 = sphi 0, %s20
    %s24 = sphi 0, %s23
    %s40 = sphi 0, %s24
    %s46 = sphi 0, %s48
    %s49 = sphi 0, %s46
    %s50 = sphi 0, %s49
    %s66 = sphi 0, %s50
    %s70 = sphi 0, %s70
    %s72 = sphi 0, %s70
    %s73 = sphi 0, %s72
    %s87 = sphi 0, %s73
    %s91 = sphi 0, %s91
    %s93 = sphi 0, %s91
    %s94 = sphi 0, %s93
    %s108 = sphi 0, %s94
    %s114 = sphi 0, %s116
    %s117 = sphi 0, %s114
    %s118 = sphi 0, %s117
    %s134 = sphi 0, %s118
  $region4: #{tpu_custom_call.1} parent=0 // loop_header_branch
    %13 = sbr.rel (%p11) target = $region8
  $region5: #{tpu_custom_call.1} parent=0 // loop_body
    %s15 = ssub.s32 %s10, 1
    %s16 = ssub.s32 %s10, 2
    %s17 = sadd.s32 %s10, 1
    %s18 = ssub.s32 %s10, %s17
    %p19 = scmp.eq.s32.totalorder %s18, 0
    %s21 = sadd.s32 %s20, 1
    %s22 = scalar_select %p19, %s20, %s21
    %p25 = pneg %p19
    %p26 = scmp.eq.s32.totalorder %s10, 1
    %p27 = por %p25, %p26
    %p28 = scmp.ne.s32.totalorder %s20, %s23
    %p29 = scmp.eq.s32.totalorder %s10, 0
    %p30 = por %p28, %p29
    %p31 = scmp.ne.s32.totalorder %s20, %s23
    %p32 = scmp.eq.s32.totalorder %s15, 1
    %p33 = por %p31, %p32
    %p34 = scmp.ne.s32.totalorder %s23, %s24
    %p35 = scmp.eq.s32.totalorder %s15, 0
    %p36 = por %p34, %p35
    %p37 = scmp.ne.s32.totalorder %s23, %s24
    %p38 = scmp.eq.s32.totalorder %s16, 1
    %p39 = por %p37, %p38
    %p41 = scmp.ne.s32.totalorder %s24, %s40
    %p42 = scmp.eq.s32.totalorder %s16, 0
    %p43 = por %p41, %p42
    %s44 = ssub.s32 %s10, %s17
    %p45 = scmp.eq.s32.totalorder %s44, 0
    %s47 = sadd.s32 %s46, 1
    %s48 = scalar_select %p45, %s46, %s47
    %p51 = pneg %p45
    %p52 = scmp.eq.s32.totalorder %s10, 1
    %p53 = por %p51, %p52
    %p54 = scmp.ne.s32.totalorder %s46, %s49
    %p55 = scmp.eq.s32.totalorder %s10, 0
    %p56 = por %p54, %p55
    %p57 = scmp.ne.s32.totalorder %s46, %s49
    %p58 = scmp.eq.s32.totalorder %s15, 1
    %p59 = por %p57, %p58
    %p60 = scmp.ne.s32.totalorder %s49, %s50
    %p61 = scmp.eq.s32.totalorder %s15, 0
    %p62 = por %p60, %p61
    %p63 = scmp.ne.s32.totalorder %s49, %s50
    %p64 = scmp.eq.s32.totalorder %s16, 1
    %p65 = por %p63, %p64
    %p67 = scmp.ne.s32.totalorder %s50, %s66
    %p68 = scmp.eq.s32.totalorder %s16, 0
    %p69 = por %p67, %p68
    %s71 = sadd.s32 %s70, 1
    %p74 = scmp.eq.s32.totalorder %s10, 1
    %p75 = scmp.ne.s32.totalorder %s70, %s72
    %p76 = scmp.eq.s32.totalorder %s10, 0
    %p77 = por %p75, %p76
    %p78 = scmp.ne.s32.totalorder %s70, %s72
    %p79 = scmp.eq.s32.totalorder %s15, 1
    %p80 = por %p78, %p79
    %p81 = scmp.ne.s32.totalorder %s72, %s73
    %p82 = scmp.eq.s32.totalorder %s15, 0
    %p83 = por %p81, %p82
    %p84 = scmp.ne.s32.totalorder %s72, %s73
    %p85 = scmp.eq.s32.totalorder %s16, 1
    %p86 = por %p84, %p85
    %p88 = scmp.ne.s32.totalorder %s73, %s87
    %p89 = scmp.eq.s32.totalorder %s16, 0
    %p90 = por %p88, %p89
    %s92 = sadd.s32 %s91, 1
    %p95 = scmp.eq.s32.totalorder %s10, 1
    %p96 = scmp.ne.s32.totalorder %s91, %s93
    %p97 = scmp.eq.s32.totalorder %s10, 0
    %p98 = por %p96, %p97
    %p99 = scmp.ne.s32.totalorder %s91, %s93
    %p100 = scmp.eq.s32.totalorder %s15, 1
    %p101 = por %p99, %p100
    %p102 = scmp.ne.s32.totalorder %s93, %s94
    %p103 = scmp.eq.s32.totalorder %s15, 0
    %p104 = por %p102, %p103
    %p105 = scmp.ne.s32.totalorder %s93, %s94
    %p106 = scmp.eq.s32.totalorder %s16, 1
    %p107 = por %p105, %p106
    %p109 = scmp.ne.s32.totalorder %s94, %s108
    %p110 = scmp.eq.s32.totalorder %s16, 0
    %p111 = por %p109, %p110
    %s112 = ssub.s32 %s10, %s17
    %p113 = scmp.eq.s32.totalorder %s112, 0
    %s115 = sadd.s32 %s114, 1
    %s116 = scalar_select %p113, %s114, %s115
    %p119 = pneg %p113
    %p120 = scmp.eq.s32.totalorder %s10, 1
    %p121 = por %p119, %p120
    %p122 = scmp.ne.s32.totalorder %s114, %s117
    %p123 = scmp.eq.s32.totalorder %s10, 0
    %p124 = por %p122, %p123
    %p125 = scmp.ne.s32.totalorder %s114, %s117
    %p126 = scmp.eq.s32.totalorder %s15, 1
    %p127 = por %p125, %p126
    %p128 = scmp.ne.s32.totalorder %s117, %s118
    %p129 = scmp.eq.s32.totalorder %s15, 0
    %p130 = por %p128, %p129
    %p131 = scmp.ne.s32.totalorder %s117, %s118
    %p132 = scmp.eq.s32.totalorder %s16, 1
    %p133 = por %p131, %p132
    %p135 = scmp.ne.s32.totalorder %s118, %s134
    %p136 = scmp.eq.s32.totalorder %s16, 0
    %p137 = por %p135, %p136
    %p138 = scmp.le.s32.totalorder 1, %s10
    %p139 = scmp.lt.s32.totalorder %s10, 3
    %p140 = pnand %p138, %p139
    %p141 = pneg %p140
    // Predicated region
    $region9: #{tpu_custom_call.1} parent=5 // pred_check
      _
    $region10: #{tpu_custom_call.1} parent=5 // pred_check_branch
      %143 = sbr.rel (%p140) target = $region12
    $region11: #{tpu_custom_call.1} parent=5 // pred_region
      %s144 = ssub.s32 %s10, 1
      // Predicated region
      $region13: #{tpu_custom_call.1} parent=11 // pred_check
        %p145 = pneg %p83
      $region14: #{tpu_custom_call.1} parent=11 // pred_check_branch
        %147 = sbr.rel (%p145) target = $region16
      $region15: #{tpu_custom_call.1} parent=11 // pred_region
        _
      $region16: #{tpu_custom_call.1} parent=11 // pred_fallthru
        _
      // Predicated region
      $region17: #{tpu_custom_call.1} parent=11 // pred_check
        %p148 = pneg %p104
      $region18: #{tpu_custom_call.1} parent=11 // pred_check_branch
        %150 = sbr.rel (%p148) target = $region20
      $region19: #{tpu_custom_call.1} parent=11 // pred_region
        _
      $region20: #{tpu_custom_call.1} parent=11 // pred_fallthru
        _
    $region12: #{tpu_custom_call.1} parent=5 // pred_fallthru
      _
    %p151 = scmp.lt.s32.totalorder %s10, 2
    // Predicated region
    $region21: #{tpu_custom_call.1} parent=5 // pred_check
      %p152 = pneg %p151
    $region22: #{tpu_custom_call.1} parent=5 // pred_check_branch
      %154 = sbr.rel (%p152) target = $region24
    $region23: #{tpu_custom_call.1} parent=5 // pred_region
      // Predicated region
      $region25: #{tpu_custom_call.1} parent=23 // pred_check
        %p155 = pneg %p30
      $region26: #{tpu_custom_call.1} parent=23 // pred_check_branch
        %157 = sbr.rel (%p155) target = $region28
      $region27: #{tpu_custom_call.1} parent=23 // pred_region
        %s158 = smul.u32 32, %s10
        %p159 = scmp.lt.s32.totalorder %s158, 63
        %s160 = scalar_select %p159, %s158, 63
        %s161 = smul.addr %s160, 8
        %s162 = scalar_lea.vmem %s0, %s161
        %s163 = smul.u32 32, %s10
      $region28: #{tpu_custom_call.1} parent=23 // pred_fallthru
        _
      // Predicated region
      $region29: #{tpu_custom_call.1} parent=23 // pred_check
        %p164 = pneg %p56
      $region30: #{tpu_custom_call.1} parent=23 // pred_check_branch
        %166 = sbr.rel (%p164) target = $region32
      $region31: #{tpu_custom_call.1} parent=23 // pred_region
        %s167 = smul.u32 32, %s10
        %p168 = scmp.lt.s32.totalorder %s167, 63
        %s169 = scalar_select %p168, %s167, 63
        %s170 = smul.addr %s169, 8
        %s171 = scalar_lea.vmem %s1, %s170
        %s172 = smul.u32 32, %s10
      $region32: #{tpu_custom_call.1} parent=23 // pred_fallthru
        _
    $region24: #{tpu_custom_call.1} parent=5 // pred_fallthru
      _
    %p173 = scmp.le.s32.totalorder 1, %s10
    %p174 = scmp.lt.s32.totalorder %s10, 3
    %p175 = pnand %p173, %p174
    %p176 = pneg %p175
    // Predicated region
    $region33: #{tpu_custom_call.1} parent=5 // pred_check
      _
    $region34: #{tpu_custom_call.1} parent=5 // pred_check_branch
      %178 = sbr.rel (%p175) target = $region36
    $region35: #{tpu_custom_call.1} parent=5 // pred_region
      %s179 = ssub.s32 %s10, 1
      %s180 = smul.u32 32, %s15
      %p181 = scmp.lt.s32.totalorder %s180, 63
      %s182 = scalar_select %p181, %s180, 63
      %s183 = smul.addr %s182, 8
      %s184 = scalar_lea.vmem %s0, %s183
      %p185 = pneg %p36
      %p186 = pneg %p33
      %s187 = smul.u32 32, %s15
      %p188 = scmp.lt.s32.totalorder %s187, 63
      %s189 = scalar_select %p188, %s187, 63
      %s190 = smul.addr %s189, 8
      %s191 = scalar_lea.vmem %s1, %s190
      %p192 = pneg %p62
      %p193 = pneg %p59
      %p194 = pneg %p83
      %p195 = pneg %p80
      %p196 = pneg %p104
      %p197 = pneg %p101
      %p198 = pneg %p130
      %p199 = pneg %p127
      %s200 = smul.u32 32, %s15
      %p201 = scmp.lt.s32.totalorder %s200, 63
      %s202 = scalar_select %p201, %s200, 63
      %s203 = smul.addr %s202, 8
      %s204 = scalar_lea.vmem %s4, %s203
      %s205 = smul.u32 32, %s15
      %p206 = scmp.lt.s32.totalorder %s205, 63
      %s207 = scalar_select %p206, %s205, 63
      %s208 = smul.addr %s207, 8
      %s209 = scalar_lea.vmem %s0, %s208
      %s210 = smul.u32 32, %s15
      %s211 = smul.u32 32, %s15
      %p212 = scmp.lt.s32.totalorder %s211, 63
      %s213 = scalar_select %p212, %s211, 63
      %s214 = smul.addr %s213, 8
      %s215 = scalar_lea.vmem %s1, %s214
      %s216 = smul.u32 32, %s15
      %s217 = smul.u32 32, %s15
      %p218 = scmp.lt.s32.totalorder %s217, 63
      %s219 = scalar_select %p218, %s217, 63
      %s220 = smul.addr %s219, 8
      %s221 = scalar_lea.vmem %s4, %s220
      %s222 = smul.u32 32, %s15
      %v223 = vld [vmem:[%s209] sm:$0xff]
      %v224 = vld [vmem:[%s209 + $0x8] sm:$0xff]
      %v225 = vld [vmem:[%s209 + $0x10] sm:$0xff]
      %v226 = vld [vmem:[%s209 + $0x18] sm:$0xff]
      %v227 = vld [vmem:[%s209 + $0x20] sm:$0xff]
      %v228 = vld [vmem:[%s209 + $0x28] sm:$0xff]
      %v229 = vld [vmem:[%s209 + $0x30] sm:$0xff]
      %v230 = vld [vmem:[%s209 + $0x38] sm:$0xff]
      %v231 = vld [vmem:[%s209 + $0x40] sm:$0xff]
      %v232 = vld [vmem:[%s209 + $0x48] sm:$0xff]
      %v233 = vld [vmem:[%s209 + $0x50] sm:$0xff]
      %v234 = vld [vmem:[%s209 + $0x58] sm:$0xff]
      %v235 = vld [vmem:[%s209 + $0x60] sm:$0xff]
      %v236 = vld [vmem:[%s209 + $0x68] sm:$0xff]
      %v237 = vld [vmem:[%s209 + $0x70] sm:$0xff]
      %v238 = vld [vmem:[%s209 + $0x78] sm:$0xff]
      %v239 = vld [vmem:[%s209 + $0x80] sm:$0xff]
      %v240 = vld [vmem:[%s209 + $0x88] sm:$0xff]
      %v241 = vld [vmem:[%s209 + $0x90] sm:$0xff]
      %v242 = vld [vmem:[%s209 + $0x98] sm:$0xff]
      %v243 = vld [vmem:[%s209 + $0xa0] sm:$0xff]
      %v244 = vld [vmem:[%s209 + $0xa8] sm:$0xff]
      %v245 = vld [vmem:[%s209 + $0xb0] sm:$0xff]
      %v246 = vld [vmem:[%s209 + $0xb8] sm:$0xff]
      %v247 = vld [vmem:[%s209 + $0xc0] sm:$0xff]
      %v248 = vld [vmem:[%s209 + $0xc8] sm:$0xff]
      %v249 = vld [vmem:[%s209 + $0xd0] sm:$0xff]
      %v250 = vld [vmem:[%s209 + $0xd8] sm:$0xff]
      %v251 = vld [vmem:[%s209 + $0xe0] sm:$0xff]
      %v252 = vld [vmem:[%s209 + $0xe8] sm:$0xff]
      %v253 = vld [vmem:[%s209 + $0xf0] sm:$0xff]
      %v254 = vld [vmem:[%s209 + $0xf8] sm:$0xff]
      %v255 = vld [vmem:[%s215] sm:$0xff]
      %v256 = vld [vmem:[%s215 + $0x8] sm:$0xff]
      %v257 = vld [vmem:[%s215 + $0x10] sm:$0xff]
      %v258 = vld [vmem:[%s215 + $0x18] sm:$0xff]
      %v259 = vld [vmem:[%s215 + $0x20] sm:$0xff]
      %v260 = vld [vmem:[%s215 + $0x28] sm:$0xff]
      %v261 = vld [vmem:[%s215 + $0x30] sm:$0xff]
      %v262 = vld [vmem:[%s215 + $0x38] sm:$0xff]
      %v263 = vld [vmem:[%s215 + $0x40] sm:$0xff]
      %v264 = vld [vmem:[%s215 + $0x48] sm:$0xff]
      %v265 = vld [vmem:[%s215 + $0x50] sm:$0xff]
      %v266 = vld [vmem:[%s215 + $0x58] sm:$0xff]
      %v267 = vld [vmem:[%s215 + $0x60] sm:$0xff]
      %v268 = vld [vmem:[%s215 + $0x68] sm:$0xff]
      %v269 = vld [vmem:[%s215 + $0x70] sm:$0xff]
      %v270 = vld [vmem:[%s215 + $0x78] sm:$0xff]
      %v271 = vld [vmem:[%s215 + $0x80] sm:$0xff]
      %v272 = vld [vmem:[%s215 + $0x88] sm:$0xff]
      %v273 = vld [vmem:[%s215 + $0x90] sm:$0xff]
      %v274 = vld [vmem:[%s215 + $0x98] sm:$0xff]
      %v275 = vld [vmem:[%s215 + $0xa0] sm:$0xff]
      %v276 = vld [vmem:[%s215 + $0xa8] sm:$0xff]
      %v277 = vld [vmem:[%s215 + $0xb0] sm:$0xff]
      %v278 = vld [vmem:[%s215 + $0xb8] sm:$0xff]
      %v279 = vld [vmem:[%s215 + $0xc0] sm:$0xff]
      %v280 = vld [vmem:[%s215 + $0xc8] sm:$0xff]
      %v281 = vld [vmem:[%s215 + $0xd0] sm:$0xff]
      %v282 = vld [vmem:[%s215 + $0xd8] sm:$0xff]
      %v283 = vld [vmem:[%s215 + $0xe0] sm:$0xff]
      %v284 = vld [vmem:[%s215 + $0xe8] sm:$0xff]
      %v285 = vld [vmem:[%s215 + $0xf0] sm:$0xff]
      %v286 = vld [vmem:[%s215 + $0xf8] sm:$0xff]
      %v287 = vlaneseq
      %v288 = vand.u32 %v287, 127
      %v289 = vadd.s32 %v288, 128
      %290 = vset.pattern.permute.xlu0 0
      %291 = vperm.xlu0 %290, %v223
      %v292 = vpop.permute.xlu0 %291
      %293 = vset.pattern.permute.xlu0 0
      %294 = vperm.xlu0 %293, %v224
      %v295 = vpop.permute.xlu0 %294
      %296 = vset.pattern.permute.xlu0 0
      %297 = vperm.xlu0 %296, %v225
      %v298 = vpop.permute.xlu0 %297
      %299 = vset.pattern.permute.xlu0 0
      %300 = vperm.xlu0 %299, %v226
      %v301 = vpop.permute.xlu0 %300
      %302 = vset.pattern.permute.xlu0 0
      %303 = vperm.xlu0 %302, %v227
      %v304 = vpop.permute.xlu0 %303
      %305 = vset.pattern.permute.xlu0 0
      %306 = vperm.xlu0 %305, %v228
      %v307 = vpop.permute.xlu0 %306
      %308 = vset.pattern.permute.xlu0 0
      %309 = vperm.xlu0 %308, %v229
      %v310 = vpop.permute.xlu0 %309
      %311 = vset.pattern.permute.xlu0 0
      %312 = vperm.xlu0 %311, %v230
      %v313 = vpop.permute.xlu0 %312
      %314 = vset.pattern.permute.xlu0 0
      %315 = vperm.xlu0 %314, %v231
      %v316 = vpop.permute.xlu0 %315
      %317 = vset.pattern.permute.xlu0 0
      %318 = vperm.xlu0 %317, %v232
      %v319 = vpop.permute.xlu0 %318
      %320 = vset.pattern.permute.xlu0 0
      %321 = vperm.xlu0 %320, %v233
      %v322 = vpop.permute.xlu0 %321
      %323 = vset.pattern.permute.xlu0 0
      %324 = vperm.xlu0 %323, %v234
      %v325 = vpop.permute.xlu0 %324
      %326 = vset.pattern.permute.xlu0 0
      %327 = vperm.xlu0 %326, %v235
      %v328 = vpop.permute.xlu0 %327
      %329 = vset.pattern.permute.xlu0 0
      %330 = vperm.xlu0 %329, %v236
      %v331 = vpop.permute.xlu0 %330
      %332 = vset.pattern.permute.xlu0 0
      %333 = vperm.xlu0 %332, %v237
      %v334 = vpop.permute.xlu0 %333
      %335 = vset.pattern.permute.xlu0 0
      %336 = vperm.xlu0 %335, %v238
      %v337 = vpop.permute.xlu0 %336
      %338 = vset.pattern.permute.xlu0 0
      %339 = vperm.xlu0 %338, %v239
      %v340 = vpop.permute.xlu0 %339
      %341 = vset.pattern.permute.xlu0 0
      %342 = vperm.xlu0 %341, %v240
      %v343 = vpop.permute.xlu0 %342
      %344 = vset.pattern.permute.xlu0 0
      %345 = vperm.xlu0 %344, %v241
      %v346 = vpop.permute.xlu0 %345
      %347 = vset.pattern.permute.xlu0 0
      %348 = vperm.xlu0 %347, %v242
      %v349 = vpop.permute.xlu0 %348
      %350 = vset.pattern.permute.xlu0 0
      %351 = vperm.xlu0 %350, %v243
      %v352 = vpop.permute.xlu0 %351
      %353 = vset.pattern.permute.xlu0 0
      %354 = vperm.xlu0 %353, %v244
      %v355 = vpop.permute.xlu0 %354
      %356 = vset.pattern.permute.xlu0 0
      %357 = vperm.xlu0 %356, %v245
      %v358 = vpop.permute.xlu0 %357
      %359 = vset.pattern.permute.xlu0 0
      %360 = vperm.xlu0 %359, %v246
      %v361 = vpop.permute.xlu0 %360
      %362 = vset.pattern.permute.xlu0 0
      %363 = vperm.xlu0 %362, %v247
      %v364 = vpop.permute.xlu0 %363
      %365 = vset.pattern.permute.xlu0 0
      %366 = vperm.xlu0 %365, %v248
      %v367 = vpop.permute.xlu0 %366
      %368 = vset.pattern.permute.xlu0 0
      %369 = vperm.xlu0 %368, %v249
      %v370 = vpop.permute.xlu0 %369
      %371 = vset.pattern.permute.xlu0 0
      %372 = vperm.xlu0 %371, %v250
      %v373 = vpop.permute.xlu0 %372
      %374 = vset.pattern.permute.xlu0 0
      %375 = vperm.xlu0 %374, %v251
      %v376 = vpop.permute.xlu0 %375
      %377 = vset.pattern.permute.xlu0 0
      %378 = vperm.xlu0 %377, %v252
      %v379 = vpop.permute.xlu0 %378
      %380 = vset.pattern.permute.xlu0 0
      %381 = vperm.xlu0 %380, %v253
      %v382 = vpop.permute.xlu0 %381
      %383 = vset.pattern.permute.xlu0 0
      %384 = vperm.xlu0 %383, %v254
      %v385 = vpop.permute.xlu0 %384
      %vm386 = vcmp.eq.s32.totalorder %v292, %v288
      %vm387 = vcmp.eq.s32.totalorder %v292, %v289
      %vm388 = vcmp.eq.s32.totalorder %v295, %v288
      %vm389 = vcmp.eq.s32.totalorder %v295, %v289
      %vm390 = vcmp.eq.s32.totalorder %v298, %v288
      %vm391 = vcmp.eq.s32.totalorder %v298, %v289
      %vm392 = vcmp.eq.s32.totalorder %v301, %v288
      %vm393 = vcmp.eq.s32.totalorder %v301, %v289
      %vm394 = vcmp.eq.s32.totalorder %v304, %v288
      %vm395 = vcmp.eq.s32.totalorder %v304, %v289
      %vm396 = vcmp.eq.s32.totalorder %v307, %v288
      %vm397 = vcmp.eq.s32.totalorder %v307, %v289
      %vm398 = vcmp.eq.s32.totalorder %v310, %v288
      %vm399 = vcmp.eq.s32.totalorder %v310, %v289
      %vm400 = vcmp.eq.s32.totalorder %v313, %v288
      %vm401 = vcmp.eq.s32.totalorder %v313, %v289
      %vm402 = vcmp.eq.s32.totalorder %v316, %v288
      %vm403 = vcmp.eq.s32.totalorder %v316, %v289
      %vm404 = vcmp.eq.s32.totalorder %v319, %v288
      %vm405 = vcmp.eq.s32.totalorder %v319, %v289
      %vm406 = vcmp.eq.s32.totalorder %v322, %v288
      %vm407 = vcmp.eq.s32.totalorder %v322, %v289
      %vm408 = vcmp.eq.s32.totalorder %v325, %v288
      %vm409 = vcmp.eq.s32.totalorder %v325, %v289
      %vm410 = vcmp.eq.s32.totalorder %v328, %v288
      %vm411 = vcmp.eq.s32.totalorder %v328, %v289
      %vm412 = vcmp.eq.s32.totalorder %v331, %v288
      %vm413 = vcmp.eq.s32.totalorder %v331, %v289
      %vm414 = vcmp.eq.s32.totalorder %v334, %v288
      %vm415 = vcmp.eq.s32.totalorder %v334, %v289
      %vm416 = vcmp.eq.s32.totalorder %v337, %v288
      %vm417 = vcmp.eq.s32.totalorder %v337, %v289
      %vm418 = vcmp.eq.s32.totalorder %v340, %v288
      %vm419 = vcmp.eq.s32.totalorder %v340, %v289
      %vm420 = vcmp.eq.s32.totalorder %v343, %v288
      %vm421 = vcmp.eq.s32.totalorder %v343, %v289
      %vm422 = vcmp.eq.s32.totalorder %v346, %v288
      %vm423 = vcmp.eq.s32.totalorder %v346, %v289
      %vm424 = vcmp.eq.s32.totalorder %v349, %v288
      %vm425 = vcmp.eq.s32.totalorder %v349, %v289
      %vm426 = vcmp.eq.s32.totalorder %v352, %v288
      %vm427 = vcmp.eq.s32.totalorder %v352, %v289
      %vm428 = vcmp.eq.s32.totalorder %v355, %v288
      %vm429 = vcmp.eq.s32.totalorder %v355, %v289
      %vm430 = vcmp.eq.s32.totalorder %v358, %v288
      %vm431 = vcmp.eq.s32.totalorder %v358, %v289
      %vm432 = vcmp.eq.s32.totalorder %v361, %v288
      %vm433 = vcmp.eq.s32.totalorder %v361, %v289
      %vm434 = vcmp.eq.s32.totalorder %v364, %v288
      %vm435 = vcmp.eq.s32.totalorder %v364, %v289
      %vm436 = vcmp.eq.s32.totalorder %v367, %v288
      %vm437 = vcmp.eq.s32.totalorder %v367, %v289
      %vm438 = vcmp.eq.s32.totalorder %v370, %v288
      %vm439 = vcmp.eq.s32.totalorder %v370, %v289
      %vm440 = vcmp.eq.s32.totalorder %v373, %v288
      %vm441 = vcmp.eq.s32.totalorder %v373, %v289
      %vm442 = vcmp.eq.s32.totalorder %v376, %v288
      %vm443 = vcmp.eq.s32.totalorder %v376, %v289
      %vm444 = vcmp.eq.s32.totalorder %v379, %v288
      %vm445 = vcmp.eq.s32.totalorder %v379, %v289
      %vm446 = vcmp.eq.s32.totalorder %v382, %v288
      %vm447 = vcmp.eq.s32.totalorder %v382, %v289
      %vm448 = vcmp.eq.s32.totalorder %v385, %v288
      %vm449 = vcmp.eq.s32.totalorder %v385, %v289
      %v450 = vsel %vm386, 1, 0
      %v451 = vsel %vm387, 1, 0
      %v452 = vsel %vm388, 1, 0
      %v453 = vsel %vm389, 1, 0
      %v454 = vsel %vm390, 1, 0
      %v455 = vsel %vm391, 1, 0
      %v456 = vsel %vm392, 1, 0
      %v457 = vsel %vm393, 1, 0
      %v458 = vsel %vm394, 1, 0
      %v459 = vsel %vm395, 1, 0
      %v460 = vsel %vm396, 1, 0
      %v461 = vsel %vm397, 1, 0
      %v462 = vsel %vm398, 1, 0
      %v463 = vsel %vm399, 1, 0
      %v464 = vsel %vm400, 1, 0
      %v465 = vsel %vm401, 1, 0
      %v466 = vsel %vm402, 1, 0
      %v467 = vsel %vm403, 1, 0
      %v468 = vsel %vm404, 1, 0
      %v469 = vsel %vm405, 1, 0
      %v470 = vsel %vm406, 1, 0
      %v471 = vsel %vm407, 1, 0
      %v472 = vsel %vm408, 1, 0
      %v473 = vsel %vm409, 1, 0
      %v474 = vsel %vm410, 1, 0
      %v475 = vsel %vm411, 1, 0
      %v476 = vsel %vm412, 1, 0
      %v477 = vsel %vm413, 1, 0
      %v478 = vsel %vm414, 1, 0
      %v479 = vsel %vm415, 1, 0
      %v480 = vsel %vm416, 1, 0
      %v481 = vsel %vm417, 1, 0
      %v482 = vsel %vm418, 1, 0
      %v483 = vsel %vm419, 1, 0
      %v484 = vsel %vm420, 1, 0
      %v485 = vsel %vm421, 1, 0
      %v486 = vsel %vm422, 1, 0
      %v487 = vsel %vm423, 1, 0
      %v488 = vsel %vm424, 1, 0
      %v489 = vsel %vm425, 1, 0
      %v490 = vsel %vm426, 1, 0
      %v491 = vsel %vm427, 1, 0
      %v492 = vsel %vm428, 1, 0
      %v493 = vsel %vm429, 1, 0
      %v494 = vsel %vm430, 1, 0
      %v495 = vsel %vm431, 1, 0
      %v496 = vsel %vm432, 1, 0
      %v497 = vsel %vm433, 1, 0
      %v498 = vsel %vm434, 1, 0
      %v499 = vsel %vm435, 1, 0
      %v500 = vsel %vm436, 1, 0
      %v501 = vsel %vm437, 1, 0
      %v502 = vsel %vm438, 1, 0
      %v503 = vsel %vm439, 1, 0
      %v504 = vsel %vm440, 1, 0
      %v505 = vsel %vm441, 1, 0
      %v506 = vsel %vm442, 1, 0
      %v507 = vsel %vm443, 1, 0
      %v508 = vsel %vm444, 1, 0
      %v509 = vsel %vm445, 1, 0
      %v510 = vsel %vm446, 1, 0
      %v511 = vsel %vm447, 1, 0
      %v512 = vsel %vm448, 1, 0
      %v513 = vsel %vm449, 1, 0
      %v514 = vcvt.s32.f32 %v450
      %v515 = vcvt.s32.f32 %v451
      %v516 = vcvt.s32.f32 %v452
      %v517 = vcvt.s32.f32 %v453
      %v518 = vcvt.s32.f32 %v454
      %v519 = vcvt.s32.f32 %v455
      %v520 = vcvt.s32.f32 %v456
      %v521 = vcvt.s32.f32 %v457
      %v522 = vcvt.s32.f32 %v458
      %v523 = vcvt.s32.f32 %v459
      %v524 = vcvt.s32.f32 %v460
      %v525 = vcvt.s32.f32 %v461
      %v526 = vcvt.s32.f32 %v462
      %v527 = vcvt.s32.f32 %v463
      %v528 = vcvt.s32.f32 %v464
      %v529 = vcvt.s32.f32 %v465
      %v530 = vcvt.s32.f32 %v466
      %v531 = vcvt.s32.f32 %v467
      %v532 = vcvt.s32.f32 %v468
      %v533 = vcvt.s32.f32 %v469
      %v534 = vcvt.s32.f32 %v470
      %v535 = vcvt.s32.f32 %v471
      %v536 = vcvt.s32.f32 %v472
      %v537 = vcvt.s32.f32 %v473
      %v538 = vcvt.s32.f32 %v474
      %v539 = vcvt.s32.f32 %v475
      %v540 = vcvt.s32.f32 %v476
      %v541 = vcvt.s32.f32 %v477
      %v542 = vcvt.s32.f32 %v478
      %v543 = vcvt.s32.f32 %v479
      %v544 = vcvt.s32.f32 %v480
      %v545 = vcvt.s32.f32 %v481
      %v546 = vcvt.s32.f32 %v482
      %v547 = vcvt.s32.f32 %v483
      %v548 = vcvt.s32.f32 %v484
      %v549 = vcvt.s32.f32 %v485
      %v550 = vcvt.s32.f32 %v486
      %v551 = vcvt.s32.f32 %v487
      %v552 = vcvt.s32.f32 %v488
      %v553 = vcvt.s32.f32 %v489
      %v554 = vcvt.s32.f32 %v490
      %v555 = vcvt.s32.f32 %v491
      %v556 = vcvt.s32.f32 %v492
      %v557 = vcvt.s32.f32 %v493
      %v558 = vcvt.s32.f32 %v494
      %v559 = vcvt.s32.f32 %v495
      %v560 = vcvt.s32.f32 %v496
      %v561 = vcvt.s32.f32 %v497
      %v562 = vcvt.s32.f32 %v498
      %v563 = vcvt.s32.f32 %v499
      %v564 = vcvt.s32.f32 %v500
      %v565 = vcvt.s32.f32 %v501
      %v566 = vcvt.s32.f32 %v502
      %v567 = vcvt.s32.f32 %v503
      %v568 = vcvt.s32.f32 %v504
      %v569 = vcvt.s32.f32 %v505
      %v570 = vcvt.s32.f32 %v506
      %v571 = vcvt.s32.f32 %v507
      %v572 = vcvt.s32.f32 %v508
      %v573 = vcvt.s32.f32 %v509
      %v574 = vcvt.s32.f32 %v510
      %v575 = vcvt.s32.f32 %v511
      %v576 = vcvt.s32.f32 %v512
      %v577 = vcvt.s32.f32 %v513
      %578 = vset.pattern.permute.xlu0 0
      %579 = vperm.xlu0 %578, %v255
      %v580 = vpop.permute.xlu0 %579
      %581 = vset.pattern.permute.xlu0 0
      %582 = vperm.xlu0 %581, %v256
      %v583 = vpop.permute.xlu0 %582
      %584 = vset.pattern.permute.xlu0 0
      %585 = vperm.xlu0 %584, %v257
      %v586 = vpop.permute.xlu0 %585
      %587 = vset.pattern.permute.xlu0 0
      %588 = vperm.xlu0 %587, %v258
      %v589 = vpop.permute.xlu0 %588
      %590 = vset.pattern.permute.xlu0 0
      %591 = vperm.xlu0 %590, %v259
      %v592 = vpop.permute.xlu0 %591
      %593 = vset.pattern.permute.xlu0 0
      %594 = vperm.xlu0 %593, %v260
      %v595 = vpop.permute.xlu0 %594
      %596 = vset.pattern.permute.xlu0 0
      %597 = vperm.xlu0 %596, %v261
      %v598 = vpop.permute.xlu0 %597
      %599 = vset.pattern.permute.xlu0 0
      %600 = vperm.xlu0 %599, %v262
      %v601 = vpop.permute.xlu0 %600
      %602 = vset.pattern.permute.xlu0 0
      %603 = vperm.xlu0 %602, %v263
      %v604 = vpop.permute.xlu0 %603
      %605 = vset.pattern.permute.xlu0 0
      %606 = vperm.xlu0 %605, %v264
      %v607 = vpop.permute.xlu0 %606
      %608 = vset.pattern.permute.xlu0 0
      %609 = vperm.xlu0 %608, %v265
      %v610 = vpop.permute.xlu0 %609
      %611 = vset.pattern.permute.xlu0 0
      %612 = vperm.xlu0 %611, %v266
      %v613 = vpop.permute.xlu0 %612
      %614 = vset.pattern.permute.xlu0 0
      %615 = vperm.xlu0 %614, %v267
      %v616 = vpop.permute.xlu0 %615
      %617 = vset.pattern.permute.xlu0 0
      %618 = vperm.xlu0 %617, %v268
      %v619 = vpop.permute.xlu0 %618
      %620 = vset.pattern.permute.xlu0 0
      %621 = vperm.xlu0 %620, %v269
      %v622 = vpop.permute.xlu0 %621
      %623 = vset.pattern.permute.xlu0 0
      %624 = vperm.xlu0 %623, %v270
      %v625 = vpop.permute.xlu0 %624
      %626 = vset.pattern.permute.xlu0 0
      %627 = vperm.xlu0 %626, %v271
      %v628 = vpop.permute.xlu0 %627
      %629 = vset.pattern.permute.xlu0 0
      %630 = vperm.xlu0 %629, %v272
      %v631 = vpop.permute.xlu0 %630
      %632 = vset.pattern.permute.xlu0 0
      %633 = vperm.xlu0 %632, %v273
      %v634 = vpop.permute.xlu0 %633
      %635 = vset.pattern.permute.xlu0 0
      %636 = vperm.xlu0 %635, %v274
      %v637 = vpop.permute.xlu0 %636
      %638 = vset.pattern.permute.xlu0 0
      %639 = vperm.xlu0 %638, %v275
      %v640 = vpop.permute.xlu0 %639
      %641 = vset.pattern.permute.xlu0 0
      %642 = vperm.xlu0 %641, %v276
      %v643 = vpop.permute.xlu0 %642
      %644 = vset.pattern.permute.xlu0 0
      %645 = vperm.xlu0 %644, %v277
      %v646 = vpop.permute.xlu0 %645
      %647 = vset.pattern.permute.xlu0 0
      %648 = vperm.xlu0 %647, %v278
      %v649 = vpop.permute.xlu0 %648
      %650 = vset.pattern.permute.xlu0 0
      %651 = vperm.xlu0 %650, %v279
      %v652 = vpop.permute.xlu0 %651
      %653 = vset.pattern.permute.xlu0 0
      %654 = vperm.xlu0 %653, %v280
      %v655 = vpop.permute.xlu0 %654
      %656 = vset.pattern.permute.xlu0 0
      %657 = vperm.xlu0 %656, %v281
      %v658 = vpop.permute.xlu0 %657
      %659 = vset.pattern.permute.xlu0 0
      %660 = vperm.xlu0 %659, %v282
      %v661 = vpop.permute.xlu0 %660
      %662 = vset.pattern.permute.xlu0 0
      %663 = vperm.xlu0 %662, %v283
      %v664 = vpop.permute.xlu0 %663
      %665 = vset.pattern.permute.xlu0 0
      %666 = vperm.xlu0 %665, %v284
      %v667 = vpop.permute.xlu0 %666
      %668 = vset.pattern.permute.xlu0 0
      %669 = vperm.xlu0 %668, %v285
      %v670 = vpop.permute.xlu0 %669
      %671 = vset.pattern.permute.xlu0 0
      %672 = vperm.xlu0 %671, %v286
      %v673 = vpop.permute.xlu0 %672
      %vm674 = vcmp.eq.s32.totalorder %v580, %v288
      %vm675 = vcmp.eq.s32.totalorder %v580, %v289
      %vm676 = vcmp.eq.s32.totalorder %v583, %v288
      %vm677 = vcmp.eq.s32.totalorder %v583, %v289
      %vm678 = vcmp.eq.s32.totalorder %v586, %v288
      %vm679 = vcmp.eq.s32.totalorder %v586, %v289
      %vm680 = vcmp.eq.s32.totalorder %v589, %v288
      %vm681 = vcmp.eq.s32.totalorder %v589, %v289
      %vm682 = vcmp.eq.s32.totalorder %v592, %v288
      %vm683 = vcmp.eq.s32.totalorder %v592, %v289
      %vm684 = vcmp.eq.s32.totalorder %v595, %v288
      %vm685 = vcmp.eq.s32.totalorder %v595, %v289
      %vm686 = vcmp.eq.s32.totalorder %v598, %v288
      %vm687 = vcmp.eq.s32.totalorder %v598, %v289
      %vm688 = vcmp.eq.s32.totalorder %v601, %v288
      %vm689 = vcmp.eq.s32.totalorder %v601, %v289
      %vm690 = vcmp.eq.s32.totalorder %v604, %v288
      %vm691 = vcmp.eq.s32.totalorder %v604, %v289
      %vm692 = vcmp.eq.s32.totalorder %v607, %v288
      %vm693 = vcmp.eq.s32.totalorder %v607, %v289
      %vm694 = vcmp.eq.s32.totalorder %v610, %v288
      %vm695 = vcmp.eq.s32.totalorder %v610, %v289
      %vm696 = vcmp.eq.s32.totalorder %v613, %v288
      %vm697 = vcmp.eq.s32.totalorder %v613, %v289
      %vm698 = vcmp.eq.s32.totalorder %v616, %v288
      %vm699 = vcmp.eq.s32.totalorder %v616, %v289
      %vm700 = vcmp.eq.s32.totalorder %v619, %v288
      %vm701 = vcmp.eq.s32.totalorder %v619, %v289
      %vm702 = vcmp.eq.s32.totalorder %v622, %v288
      %vm703 = vcmp.eq.s32.totalorder %v622, %v289
      %vm704 = vcmp.eq.s32.totalorder %v625, %v288
      %vm705 = vcmp.eq.s32.totalorder %v625, %v289
      %vm706 = vcmp.eq.s32.totalorder %v628, %v288
      %vm707 = vcmp.eq.s32.totalorder %v628, %v289
      %vm708 = vcmp.eq.s32.totalorder %v631, %v288
      %vm709 = vcmp.eq.s32.totalorder %v631, %v289
      %vm710 = vcmp.eq.s32.totalorder %v634, %v288
      %vm711 = vcmp.eq.s32.totalorder %v634, %v289
      %vm712 = vcmp.eq.s32.totalorder %v637, %v288
      %vm713 = vcmp.eq.s32.totalorder %v637, %v289
      %vm714 = vcmp.eq.s32.totalorder %v640, %v288
      %vm715 = vcmp.eq.s32.totalorder %v640, %v289
      %vm716 = vcmp.eq.s32.totalorder %v643, %v288
      %vm717 = vcmp.eq.s32.totalorder %v643, %v289
      %vm718 = vcmp.eq.s32.totalorder %v646, %v288
      %vm719 = vcmp.eq.s32.totalorder %v646, %v289
      %vm720 = vcmp.eq.s32.totalorder %v649, %v288
      %vm721 = vcmp.eq.s32.totalorder %v649, %v289
      %vm722 = vcmp.eq.s32.totalorder %v652, %v288
      %vm723 = vcmp.eq.s32.totalorder %v652, %v289
      %vm724 = vcmp.eq.s32.totalorder %v655, %v288
      %vm725 = vcmp.eq.s32.totalorder %v655, %v289
      %vm726 = vcmp.eq.s32.totalorder %v658, %v288
      %vm727 = vcmp.eq.s32.totalorder %v658, %v289
      %vm728 = vcmp.eq.s32.totalorder %v661, %v288
      %vm729 = vcmp.eq.s32.totalorder %v661, %v289
      %vm730 = vcmp.eq.s32.totalorder %v664, %v288
      %vm731 = vcmp.eq.s32.totalorder %v664, %v289
      %vm732 = vcmp.eq.s32.totalorder %v667, %v288
      %vm733 = vcmp.eq.s32.totalorder %v667, %v289
      %vm734 = vcmp.eq.s32.totalorder %v670, %v288
      %vm735 = vcmp.eq.s32.totalorder %v670, %v289
      %vm736 = vcmp.eq.s32.totalorder %v673, %v288
      %vm737 = vcmp.eq.s32.totalorder %v673, %v289
      %v738 = vsel %vm674, 1, 0
      %v739 = vsel %vm675, 1, 0
      %v740 = vsel %vm676, 1, 0
      %v741 = vsel %vm677, 1, 0
      %v742 = vsel %vm678, 1, 0
      %v743 = vsel %vm679, 1, 0
      %v744 = vsel %vm680, 1, 0
      %v745 = vsel %vm681, 1, 0
      %v746 = vsel %vm682, 1, 0
      %v747 = vsel %vm683, 1, 0
      %v748 = vsel %vm684, 1, 0
      %v749 = vsel %vm685, 1, 0
      %v750 = vsel %vm686, 1, 0
      %v751 = vsel %vm687, 1, 0
      %v752 = vsel %vm688, 1, 0
      %v753 = vsel %vm689, 1, 0
      %v754 = vsel %vm690, 1, 0
      %v755 = vsel %vm691, 1, 0
      %v756 = vsel %vm692, 1, 0
      %v757 = vsel %vm693, 1, 0
      %v758 = vsel %vm694, 1, 0
      %v759 = vsel %vm695, 1, 0
      %v760 = vsel %vm696, 1, 0
      %v761 = vsel %vm697, 1, 0
      %v762 = vsel %vm698, 1, 0
      %v763 = vsel %vm699, 1, 0
      %v764 = vsel %vm700, 1, 0
      %v765 = vsel %vm701, 1, 0
      %v766 = vsel %vm702, 1, 0
      %v767 = vsel %vm703, 1, 0
      %v768 = vsel %vm704, 1, 0
      %v769 = vsel %vm705, 1, 0
      %v770 = vsel %vm706, 1, 0
      %v771 = vsel %vm707, 1, 0
      %v772 = vsel %vm708, 1, 0
      %v773 = vsel %vm709, 1, 0
      %v774 = vsel %vm710, 1, 0
      %v775 = vsel %vm711, 1, 0
      %v776 = vsel %vm712, 1, 0
      %v777 = vsel %vm713, 1, 0
      %v778 = vsel %vm714, 1, 0
      %v779 = vsel %vm715, 1, 0
      %v780 = vsel %vm716, 1, 0
      %v781 = vsel %vm717, 1, 0
      %v782 = vsel %vm718, 1, 0
      %v783 = vsel %vm719, 1, 0
      %v784 = vsel %vm720, 1, 0
      %v785 = vsel %vm721, 1, 0
      %v786 = vsel %vm722, 1, 0
      %v787 = vsel %vm723, 1, 0
      %v788 = vsel %vm724, 1, 0
      %v789 = vsel %vm725, 1, 0
      %v790 = vsel %vm726, 1, 0
      %v791 = vsel %vm727, 1, 0
      %v792 = vsel %vm728, 1, 0
      %v793 = vsel %vm729, 1, 0
      %v794 = vsel %vm730, 1, 0
      %v795 = vsel %vm731, 1, 0
      %v796 = vsel %vm732, 1, 0
      %v797 = vsel %vm733, 1, 0
      %v798 = vsel %vm734, 1, 0
      %v799 = vsel %vm735, 1, 0
      %v800 = vsel %vm736, 1, 0
      %v801 = vsel %vm737, 1, 0
      %v802 = vcvt.s32.f32 %v738
      %v803 = vcvt.s32.f32 %v739
      %v804 = vcvt.s32.f32 %v740
      %v805 = vcvt.s32.f32 %v741
      %v806 = vcvt.s32.f32 %v742
      %v807 = vcvt.s32.f32 %v743
      %v808 = vcvt.s32.f32 %v744
      %v809 = vcvt.s32.f32 %v745
      %v810 = vcvt.s32.f32 %v746
      %v811 = vcvt.s32.f32 %v747
      %v812 = vcvt.s32.f32 %v748
      %v813 = vcvt.s32.f32 %v749
      %v814 = vcvt.s32.f32 %v750
      %v815 = vcvt.s32.f32 %v751
      %v816 = vcvt.s32.f32 %v752
      %v817 = vcvt.s32.f32 %v753
      %v818 = vcvt.s32.f32 %v754
      %v819 = vcvt.s32.f32 %v755
      %v820 = vcvt.s32.f32 %v756
      %v821 = vcvt.s32.f32 %v757
      %v822 = vcvt.s32.f32 %v758
      %v823 = vcvt.s32.f32 %v759
      %v824 = vcvt.s32.f32 %v760
      %v825 = vcvt.s32.f32 %v761
      %v826 = vcvt.s32.f32 %v762
      %v827 = vcvt.s32.f32 %v763
      %v828 = vcvt.s32.f32 %v764
      %v829 = vcvt.s32.f32 %v765
      %v830 = vcvt.s32.f32 %v766
      %v831 = vcvt.s32.f32 %v767
      %v832 = vcvt.s32.f32 %v768
      %v833 = vcvt.s32.f32 %v769
      %v834 = vcvt.s32.f32 %v770
      %v835 = vcvt.s32.f32 %v771
      %v836 = vcvt.s32.f32 %v772
      %v837 = vcvt.s32.f32 %v773
      %v838 = vcvt.s32.f32 %v774
      %v839 = vcvt.s32.f32 %v775
      %v840 = vcvt.s32.f32 %v776
      %v841 = vcvt.s32.f32 %v777
      %v842 = vcvt.s32.f32 %v778
      %v843 = vcvt.s32.f32 %v779
      %v844 = vcvt.s32.f32 %v780
      %v845 = vcvt.s32.f32 %v781
      %v846 = vcvt.s32.f32 %v782
      %v847 = vcvt.s32.f32 %v783
      %v848 = vcvt.s32.f32 %v784
      %v849 = vcvt.s32.f32 %v785
      %v850 = vcvt.s32.f32 %v786
      %v851 = vcvt.s32.f32 %v787
      %v852 = vcvt.s32.f32 %v788
      %v853 = vcvt.s32.f32 %v789
      %v854 = vcvt.s32.f32 %v790
      %v855 = vcvt.s32.f32 %v791
      %v856 = vcvt.s32.f32 %v792
      %v857 = vcvt.s32.f32 %v793
      %v858 = vcvt.s32.f32 %v794
      %v859 = vcvt.s32.f32 %v795
      %v860 = vcvt.s32.f32 %v796
      %v861 = vcvt.s32.f32 %v797
      %v862 = vcvt.s32.f32 %v798
      %v863 = vcvt.s32.f32 %v799
      %v864 = vcvt.s32.f32 %v800
      %v865 = vcvt.s32.f32 %v801
      %v866 = vld [vmem:[%s2] sm:$0xff]
      %v867 = vld [vmem:[%s2 + $0x8] sm:$0xff]
      %v868 = vld [vmem:[%s2 + $0x10] sm:$0xff]
      %v869 = vld [vmem:[%s2 + $0x18] sm:$0xff]
      %v870 = vld [vmem:[%s2 + $0x20] sm:$0xff]
      %v871 = vld [vmem:[%s2 + $0x28] sm:$0xff]
      %v872 = vld [vmem:[%s2 + $0x30] sm:$0xff]
      %v873 = vld [vmem:[%s2 + $0x38] sm:$0xff]
      %v874 = vld [vmem:[%s2 + $0x40] sm:$0xff]
      %v875 = vld [vmem:[%s2 + $0x48] sm:$0xff]
      %v876 = vld [vmem:[%s2 + $0x50] sm:$0xff]
      %v877 = vld [vmem:[%s2 + $0x58] sm:$0xff]
      %v878 = vld [vmem:[%s2 + $0x60] sm:$0xff]
      %v879 = vld [vmem:[%s2 + $0x68] sm:$0xff]
      %v880 = vld [vmem:[%s2 + $0x70] sm:$0xff]
      %v881 = vld [vmem:[%s2 + $0x78] sm:$0xff]
      %v882 = vld [vmem:[%s2 + $0x80] sm:$0xff]
      %v883 = vld [vmem:[%s2 + $0x88] sm:$0xff]
      %v884 = vld [vmem:[%s2 + $0x90] sm:$0xff]
      %v885 = vld [vmem:[%s2 + $0x98] sm:$0xff]
      %v886 = vld [vmem:[%s2 + $0xa0] sm:$0xff]
      %v887 = vld [vmem:[%s2 + $0xa8] sm:$0xff]
      %v888 = vld [vmem:[%s2 + $0xb0] sm:$0xff]
      %v889 = vld [vmem:[%s2 + $0xb8] sm:$0xff]
      %v890 = vld [vmem:[%s2 + $0xc0] sm:$0xff]
      %v891 = vld [vmem:[%s2 + $0xc8] sm:$0xff]
      %v892 = vld [vmem:[%s2 + $0xd0] sm:$0xff]
      %v893 = vld [vmem:[%s2 + $0xd8] sm:$0xff]
      %v894 = vld [vmem:[%s2 + $0xe0] sm:$0xff]
      %v895 = vld [vmem:[%s2 + $0xe8] sm:$0xff]
      %v896 = vld [vmem:[%s2 + $0xf0] sm:$0xff]
      %v897 = vld [vmem:[%s2 + $0xf8] sm:$0xff]
      %898 = vmatprep.subr.mxu0 0.0
      %899 = vmatpush1.msra.mxu0 %v866
      %900 = vmatprep.subr.mxu0 0.0
      %901 = vmatpush1.msra.mxu0 %v867
      %902 = vmatprep.subr.mxu0 0.0
      %903 = vmatpush1.msra.mxu0 %v868
      %904 = vmatprep.subr.mxu0 0.0
      %905 = vmatpush1.msra.mxu0 %v869
      %906 = vmatprep.subr.mxu0 0.0
      %907 = vmatpush1.msra.mxu0 %v870
      %908 = vmatprep.subr.mxu0 0.0
      %909 = vmatpush1.msra.mxu0 %v871
      %910 = vmatprep.subr.mxu0 0.0
      %911 = vmatpush1.msra.mxu0 %v872
      %912 = vmatprep.subr.mxu0 0.0
      %913 = vmatpush1.msra.mxu0 %v873
      %914 = vmatprep.subr.mxu0 0.0
      %915 = vmatpush1.msra.mxu0 %v874
      %916 = vmatprep.subr.mxu0 0.0
      %917 = vmatpush1.msra.mxu0 %v875
      %918 = vmatprep.subr.mxu0 0.0
      %919 = vmatpush1.msra.mxu0 %v876
      %920 = vmatprep.subr.mxu0 0.0
      %921 = vmatpush1.msra.mxu0 %v877
      %922 = vmatprep.subr.mxu0 0.0
      %923 = vmatpush1.msra.mxu0 %v878
      %924 = vmatprep.subr.mxu0 0.0
      %925 = vmatpush1.msra.mxu0 %v879
      %926 = vmatprep.subr.mxu0 0.0
      %927 = vmatpush1.msra.mxu0 %v880
      %928 = vmatprep.subr.mxu0 0.0
      %929 = vmatpush1.msra.mxu0 %v881
      %930 = vmatprep.subr.mxu0 0.0
      %931 = vmatpush1.msra.mxu0 %v882
      %932 = vmatprep.subr.mxu0 0.0
      %933 = vmatpush1.msra.mxu0 %v883
      %934 = vmatprep.subr.mxu0 0.0
      %935 = vmatpush1.msra.mxu0 %v884
      %936 = vmatprep.subr.mxu0 0.0
      %937 = vmatpush1.msra.mxu0 %v885
      %938 = vmatprep.subr.mxu0 0.0
      %939 = vmatpush1.msra.mxu0 %v886
      %940 = vmatprep.subr.mxu0 0.0
      %941 = vmatpush1.msra.mxu0 %v887
      %942 = vmatprep.subr.mxu0 0.0
      %943 = vmatpush1.msra.mxu0 %v888
      %944 = vmatprep.subr.mxu0 0.0
      %945 = vmatpush1.msra.mxu0 %v889
      %946 = vmatprep.subr.mxu0 0.0
      %947 = vmatpush1.msra.mxu0 %v890
      %948 = vmatprep.subr.mxu0 0.0
      %949 = vmatpush1.msra.mxu0 %v891
      %950 = vmatprep.subr.mxu0 0.0
      %951 = vmatpush1.msra.mxu0 %v892
      %952 = vmatprep.subr.mxu0 0.0
      %953 = vmatpush1.msra.mxu0 %v893
      %954 = vmatprep.subr.mxu0 0.0
      %955 = vmatpush1.msra.mxu0 %v894
      %956 = vmatprep.subr.mxu0 0.0
      %957 = vmatpush1.msra.mxu0 %v895
      %958 = vmatprep.subr.mxu0 0.0
      %959 = vmatpush1.msra.mxu0 %v896
      %960 = vmatprep.subr.mxu0 0.0
      %961 = vmatpush1.msra.mxu0 %v897
      %962 = vmatprep.mubr.f32.mxu0 %v515
      %963 = vmatmul.mubr.f32.gmra.mrb[0].mxu0 %v514
      %v964 = vpop.f32.mrb[0].mxu0
      %v965 = vadd.f32 0.0, %v964
      %v966 = vpop.f32.mrb[0].mxu0
      %967 = vmatprep.mubr.f32.mxu0 %v517
      %968 = vmatmul.mubr.f32.gmra.mrb[0].mxu0 %v516
      %v969 = vpop.f32.mrb[0].mxu0
      %v970 = vadd.f32 0.0, %v969
      %v971 = vpop.f32.mrb[0].mxu0
      %972 = vmatprep.mubr.f32.mxu0 %v519
      %973 = vmatmul.mubr.f32.gmra.mrb[0].mxu0 %v518
      %v974 = vpop.f32.mrb[0].mxu0
      %v975 = vadd.f32 0.0, %v974
      %v976 = vpop.f32.mrb[0].mxu0
      %977 = vmatprep.mubr.f32.mxu0 %v521
      %978 = vmatmul.mubr.f32.gmra.mrb[0].mxu0 %v520
      %v979 = vpop.f32.mrb[0].mxu0
      %v980 = vadd.f32 0.0, %v979
      %v981 = vpop.f32.mrb[0].mxu0
      %982 = vmatprep.mubr.f32.mxu0 %v523
      %983 = vmatmul.mubr.f32.gmra.mrb[0].mxu0 %v522
      %v984 = vpop.f32.mrb[0].mxu0
      %v985 = vadd.f32 0.0, %v984
      %v986 = vpop.f32.mrb[0].mxu0
      %987 = vmatprep.mubr.f32.mxu0 %v525
      %988 = vmatmul.mubr.f32.gmra.mrb[0].mxu0 %v524
      %v989 = vpop.f32.mrb[0].mxu0
      %v990 = vadd.f32 0.0, %v989
      %v991 = vpop.f32.mrb[0].mxu0
      %992 = vmatprep.mubr.f32.mxu0 %v527
      %993 = vmatmul.mubr.f32.gmra.mrb[0].mxu0 %v526
      %v994 = vpop.f32.mrb[0].mxu0
      %v995 = vadd.f32 0.0, %v994
      %v996 = vpop.f32.mrb[0].mxu0
      %997 = vmatprep.mubr.f32.mxu0 %v529
      %998 = vmatmul.mubr.f32.gmra.mrb[0].mxu0 %v528
      %v999 = vpop.f32.mrb[0].mxu0
      %v1000 = vadd.f32 0.0, %v999
      %v1001 = vpop.f32.mrb[0].mxu0
      %1002 = vmatprep.mubr.f32.mxu0 %v531
      %1003 = vmatmul.mubr.f32.gmra.mrb[0].mxu0 %v530
      %v1004 = vpop.f32.mrb[0].mxu0
      %v1005 = vadd.f32 0.0, %v1004
      %v1006 = vpop.f32.mrb[0].mxu0
      %1007 = vmatprep.mubr.f32.mxu0 %v533
      %1008 = vmatmul.mubr.f32.gmra.mrb[0].mxu0 %v532
      %v1009 = vpop.f32.mrb[0].mxu0
      %v1010 = vadd.f32 0.0, %v1009
      %v1011 = vpop.f32.mrb[0].mxu0
      %1012 = vmatprep.mubr.f32.mxu0 %v535
      %1013 = vmatmul.mubr.f32.gmra.mrb[0].mxu0 %v534
      %v1014 = vpop.f32.mrb[0].mxu0
      %v1015 = vadd.f32 0.0, %v1014
      %v1016 = vpop.f32.mrb[0].mxu0
      %1017 = vmatprep.mubr.f32.mxu0 %v537
      %1018 = vmatmul.mubr.f32.gmra.mrb[0].mxu0 %v536
      %v1019 = vpop.f32.mrb[0].mxu0
      %v1020 = vadd.f32 0.0, %v1019
      %v1021 = vpop.f32.mrb[0].mxu0
      %1022 = vmatprep.mubr.f32.mxu0 %v539
      %1023 = vmatmul.mubr.f32.gmra.mrb[0].mxu0 %v538
      %v1024 = vpop.f32.mrb[0].mxu0
      %v1025 = vadd.f32 0.0, %v1024
      %v1026 = vpop.f32.mrb[0].mxu0
      %1027 = vmatprep.mubr.f32.mxu0 %v541
      %1028 = vmatmul.mubr.f32.gmra.mrb[0].mxu0 %v540
      %v1029 = vpop.f32.mrb[0].mxu0
      %v1030 = vadd.f32 0.0, %v1029
      %v1031 = vpop.f32.mrb[0].mxu0
      %1032 = vmatprep.mubr.f32.mxu0 %v543
      %1033 = vmatmul.mubr.f32.gmra.mrb[0].mxu0 %v542
      %v1034 = vpop.f32.mrb[0].mxu0
      %v1035 = vadd.f32 0.0, %v1034
      %v1036 = vpop.f32.mrb[0].mxu0
      %1037 = vmatprep.mubr.f32.mxu0 %v545
      %1038 = vmatmul.mubr.f32.gmra.mrb[0].mxu0 %v544
      %v1039 = vpop.f32.mrb[0].mxu0
      %v1040 = vadd.f32 0.0, %v1039
      %v1041 = vpop.f32.mrb[0].mxu0
      %1042 = vmatprep.mubr.f32.mxu0 %v547
      %1043 = vmatmul.mubr.f32.gmra.mrb[0].mxu0 %v546
      %v1044 = vpop.f32.mrb[0].mxu0
      %v1045 = vadd.f32 0.0, %v1044
      %v1046 = vpop.f32.mrb[0].mxu0
      %1047 = vmatprep.mubr.f32.mxu0 %v549
      %1048 = vmatmul.mubr.f32.gmra.mrb[0].mxu0 %v548
      %v1049 = vpop.f32.mrb[0].mxu0
      %v1050 = vadd.f32 0.0, %v1049
      %v1051 = vpop.f32.mrb[0].mxu0
      %1052 = vmatprep.mubr.f32.mxu0 %v551
      %1053 = vmatmul.mubr.f32.gmra.mrb[0].mxu0 %v550
      %v1054 = vpop.f32.mrb[0].mxu0
      %v1055 = vadd.f32 0.0, %v1054
      %v1056 = vpop.f32.mrb[0].mxu0
      %1057 = vmatprep.mubr.f32.mxu0 %v553
      %1058 = vmatmul.mubr.f32.gmra.mrb[0].mxu0 %v552
      %v1059 = vpop.f32.mrb[0].mxu0
      %v1060 = vadd.f32 0.0, %v1059
      %v1061 = vpop.f32.mrb[0].mxu0
      %1062 = vmatprep.mubr.f32.mxu0 %v555
      %1063 = vmatmul.mubr.f32.gmra.mrb[0].mxu0 %v554
      %v1064 = vpop.f32.mrb[0].mxu0
      %v1065 = vadd.f32 0.0, %v1064
      %v1066 = vpop.f32.mrb[0].mxu0
      %1067 = vmatprep.mubr.f32.mxu0 %v557
      %1068 = vmatmul.mubr.f32.gmra.mrb[0].mxu0 %v556
      %v1069 = vpop.f32.mrb[0].mxu0
      %v1070 = vadd.f32 0.0, %v1069
      %v1071 = vpop.f32.mrb[0].mxu0
      %1072 = vmatprep.mubr.f32.mxu0 %v559
      %1073 = vmatmul.mubr.f32.gmra.mrb[0].mxu0 %v558
      %v1074 = vpop.f32.mrb[0].mxu0
      %v1075 = vadd.f32 0.0, %v1074
      %v1076 = vpop.f32.mrb[0].mxu0
      %1077 = vmatprep.mubr.f32.mxu0 %v561
      %1078 = vmatmul.mubr.f32.gmra.mrb[0].mxu0 %v560
      %v1079 = vpop.f32.mrb[0].mxu0
      %v1080 = vadd.f32 0.0, %v1079
      %v1081 = vpop.f32.mrb[0].mxu0
      %1082 = vmatprep.mubr.f32.mxu0 %v563
      %1083 = vmatmul.mubr.f32.gmra.mrb[0].mxu0 %v562
      %v1084 = vpop.f32.mrb[0].mxu0
      %v1085 = vadd.f32 0.0, %v1084
      %v1086 = vpop.f32.mrb[0].mxu0
      %1087 = vmatprep.mubr.f32.mxu0 %v565
      %1088 = vmatmul.mubr.f32.gmra.mrb[0].mxu0 %v564
      %v1089 = vpop.f32.mrb[0].mxu0
      %v1090 = vadd.f32 0.0, %v1089
      %v1091 = vpop.f32.mrb[0].mxu0
      %1092 = vmatprep.mubr.f32.mxu0 %v567
      %1093 = vmatmul.mubr.f32.gmra.mrb[0].mxu0 %v566
      %v1094 = vpop.f32.mrb[0].mxu0
      %v1095 = vadd.f32 0.0, %v1094
      %v1096 = vpop.f32.mrb[0].mxu0
      %1097 = vmatprep.mubr.f32.mxu0 %v569
      %1098 = vmatmul.mubr.f32.gmra.mrb[0].mxu0 %v568
      %v1099 = vpop.f32.mrb[0].mxu0
      %v1100 = vadd.f32 0.0, %v1099
      %v1101 = vpop.f32.mrb[0].mxu0
      %1102 = vmatprep.mubr.f32.mxu0 %v571
      %1103 = vmatmul.mubr.f32.gmra.mrb[0].mxu0 %v570
      %v1104 = vpop.f32.mrb[0].mxu0
      %v1105 = vadd.f32 0.0, %v1104
      %v1106 = vpop.f32.mrb[0].mxu0
      %1107 = vmatprep.mubr.f32.mxu0 %v573
      %1108 = vmatmul.mubr.f32.gmra.mrb[0].mxu0 %v572
      %v1109 = vpop.f32.mrb[0].mxu0
      %v1110 = vadd.f32 0.0, %v1109
      %v1111 = vpop.f32.mrb[0].mxu0
      %1112 = vmatprep.mubr.f32.mxu0 %v575
      %1113 = vmatmul.mubr.f32.gmra.mrb[0].mxu0 %v574
      %v1114 = vpop.f32.mrb[0].mxu0
      %v1115 = vadd.f32 0.0, %v1114
      %v1116 = vpop.f32.mrb[0].mxu0
      %1117 = vmatprep.mubr.f32.mxu0 %v577
      %1118 = vmatmul.mubr.f32.gmra.mrb[0].mxu0 %v576
      %v1119 = vpop.f32.mrb[0].mxu0
      %v1120 = vadd.f32 0.0, %v1119
      %v1121 = vpop.f32.mrb[0].mxu0
      %1122 = vdwg.mxu0
      %v1123 = vld [vmem:[%s3] sm:$0xff]
      %v1124 = vld [vmem:[%s3 + $0x8] sm:$0xff]
      %v1125 = vld [vmem:[%s3 + $0x10] sm:$0xff]
      %v1126 = vld [vmem:[%s3 + $0x18] sm:$0xff]
      %v1127 = vld [vmem:[%s3 + $0x20] sm:$0xff]
      %v1128 = vld [vmem:[%s3 + $0x28] sm:$0xff]
      %v1129 = vld [vmem:[%s3 + $0x30] sm:$0xff]
      %v1130 = vld [vmem:[%s3 + $0x38] sm:$0xff]
      %v1131 = vld [vmem:[%s3 + $0x40] sm:$0xff]
      %v1132 = vld [vmem:[%s3 + $0x48] sm:$0xff]
      %v1133 = vld [vmem:[%s3 + $0x50] sm:$0xff]
      %v1134 = vld [vmem:[%s3 + $0x58] sm:$0xff]
      %v1135 = vld [vmem:[%s3 + $0x60] sm:$0xff]
      %v1136 = vld [vmem:[%s3 + $0x68] sm:$0xff]
      %v1137 = vld [vmem:[%s3 + $0x70] sm:$0xff]
      %v1138 = vld [vmem:[%s3 + $0x78] sm:$0xff]
      %v1139 = vld [vmem:[%s3 + $0x80] sm:$0xff]
      %v1140 = vld [vmem:[%s3 + $0x88] sm:$0xff]
      %v1141 = vld [vmem:[%s3 + $0x90] sm:$0xff]
      %v1142 = vld [vmem:[%s3 + $0x98] sm:$0xff]
      %v1143 = vld [vmem:[%s3 + $0xa0] sm:$0xff]
      %v1144 = vld [vmem:[%s3 + $0xa8] sm:$0xff]
      %v1145 = vld [vmem:[%s3 + $0xb0] sm:$0xff]
      %v1146 = vld [vmem:[%s3 + $0xb8] sm:$0xff]
      %v1147 = vld [vmem:[%s3 + $0xc0] sm:$0xff]
      %v1148 = vld [vmem:[%s3 + $0xc8] sm:$0xff]
      %v1149 = vld [vmem:[%s3 + $0xd0] sm:$0xff]
      %v1150 = vld [vmem:[%s3 + $0xd8] sm:$0xff]
      %v1151 = vld [vmem:[%s3 + $0xe0] sm:$0xff]
      %v1152 = vld [vmem:[%s3 + $0xe8] sm:$0xff]
      %v1153 = vld [vmem:[%s3 + $0xf0] sm:$0xff]
      %v1154 = vld [vmem:[%s3 + $0xf8] sm:$0xff]
      %1155 = vmatprep.subr.mxu0 0.0
      %1156 = vmatpush1.msra.mxu0 %v1123
      %1157 = vmatprep.subr.mxu0 0.0
      %1158 = vmatpush1.msra.mxu0 %v1124
      %1159 = vmatprep.subr.mxu0 0.0
      %1160 = vmatpush1.msra.mxu0 %v1125
      %1161 = vmatprep.subr.mxu0 0.0
      %1162 = vmatpush1.msra.mxu0 %v1126
      %1163 = vmatprep.subr.mxu0 0.0
      %1164 = vmatpush1.msra.mxu0 %v1127
      %1165 = vmatprep.subr.mxu0 0.0
      %1166 = vmatpush1.msra.mxu0 %v1128
      %1167 = vmatprep.subr.mxu0 0.0
      %1168 = vmatpush1.msra.mxu0 %v1129
      %1169 = vmatprep.subr.mxu0 0.0
      %1170 = vmatpush1.msra.mxu0 %v1130
      %1171 = vmatprep.subr.mxu0 0.0
      %1172 = vmatpush1.msra.mxu0 %v1131
      %1173 = vmatprep.subr.mxu0 0.0
      %1174 = vmatpush1.msra.mxu0 %v1132
      %1175 = vmatprep.subr.mxu0 0.0
      %1176 = vmatpush1.msra.mxu0 %v1133
      %1177 = vmatprep.subr.mxu0 0.0
      %1178 = vmatpush1.msra.mxu0 %v1134
      %1179 = vmatprep.subr.mxu0 0.0
      %1180 = vmatpush1.msra.mxu0 %v1135
      %1181 = vmatprep.subr.mxu0 0.0
      %1182 = vmatpush1.msra.mxu0 %v1136
      %1183 = vmatprep.subr.mxu0 0.0
      %1184 = vmatpush1.msra.mxu0 %v1137
      %1185 = vmatprep.subr.mxu0 0.0
      %1186 = vmatpush1.msra.mxu0 %v1138
      %1187 = vmatprep.subr.mxu0 0.0
      %1188 = vmatpush1.msra.mxu0 %v1139
      %1189 = vmatprep.subr.mxu0 0.0
      %1190 = vmatpush1.msra.mxu0 %v1140
      %1191 = vmatprep.subr.mxu0 0.0
      %1192 = vmatpush1.msra.mxu0 %v1141
      %1193 = vmatprep.subr.mxu0 0.0
      %1194 = vmatpush1.msra.mxu0 %v1142
      %1195 = vmatprep.subr.mxu0 0.0
      %1196 = vmatpush1.msra.mxu0 %v1143
      %1197 = vmatprep.subr.mxu0 0.0
      %1198 = vmatpush1.msra.mxu0 %v1144
      %1199 = vmatprep.subr.mxu0 0.0
      %1200 = vmatpush1.msra.mxu0 %v1145
      %1201 = vmatprep.subr.mxu0 0.0
      %1202 = vmatpush1.msra.mxu0 %v1146
      %1203 = vmatprep.subr.mxu0 0.0
      %1204 = vmatpush1.msra.mxu0 %v1147
      %1205 = vmatprep.subr.mxu0 0.0
      %1206 = vmatpush1.msra.mxu0 %v1148
      %1207 = vmatprep.subr.mxu0 0.0
      %1208 = vmatpush1.msra.mxu0 %v1149
      %1209 = vmatprep.subr.mxu0 0.0
      %1210 = vmatpush1.msra.mxu0 %v1150
      %1211 = vmatprep.subr.mxu0 0.0
      %1212 = vmatpush1.msra.mxu0 %v1151
      %1213 = vmatprep.subr.mxu0 0.0
      %1214 = vmatpush1.msra.mxu0 %v1152
      %1215 = vmatprep.subr.mxu0 0.0
      %1216 = vmatpush1.msra.mxu0 %v1153
      %1217 = vmatprep.subr.mxu0 0.0
      %1218 = vmatpush1.msra.mxu0 %v1154
      %1219 = vmatprep.mubr.f32.mxu0 %v803
      %1220 = vmatmul.mubr.f32.gmra.mrb[0].mxu0 %v802
      %v1221 = vpop.f32.mrb[0].mxu0
      %v1222 = vadd.f32 0.0, %v1221
      %v1223 = vpop.f32.mrb[0].mxu0
      %1224 = vmatprep.mubr.f32.mxu0 %v805
      %1225 = vmatmul.mubr.f32.gmra.mrb[0].mxu0 %v804
      %v1226 = vpop.f32.mrb[0].mxu0
      %v1227 = vadd.f32 0.0, %v1226
      %v1228 = vpop.f32.mrb[0].mxu0
      %1229 = vmatprep.mubr.f32.mxu0 %v807
      %1230 = vmatmul.mubr.f32.gmra.mrb[0].mxu0 %v806
      %v1231 = vpop.f32.mrb[0].mxu0
      %v1232 = vadd.f32 0.0, %v1231
      %v1233 = vpop.f32.mrb[0].mxu0
      %1234 = vmatprep.mubr.f32.mxu0 %v809
      %1235 = vmatmul.mubr.f32.gmra.mrb[0].mxu0 %v808
      %v1236 = vpop.f32.mrb[0].mxu0
      %v1237 = vadd.f32 0.0, %v1236
      %v1238 = vpop.f32.mrb[0].mxu0
      %1239 = vmatprep.mubr.f32.mxu0 %v811
      %1240 = vmatmul.mubr.f32.gmra.mrb[0].mxu0 %v810
      %v1241 = vpop.f32.mrb[0].mxu0
      %v1242 = vadd.f32 0.0, %v1241
      %v1243 = vpop.f32.mrb[0].mxu0
      %1244 = vmatprep.mubr.f32.mxu0 %v813
      %1245 = vmatmul.mubr.f32.gmra.mrb[0].mxu0 %v812
      %v1246 = vpop.f32.mrb[0].mxu0
      %v1247 = vadd.f32 0.0, %v1246
      %v1248 = vpop.f32.mrb[0].mxu0
      %1249 = vmatprep.mubr.f32.mxu0 %v815
      %1250 = vmatmul.mubr.f32.gmra.mrb[0].mxu0 %v814
      %v1251 = vpop.f32.mrb[0].mxu0
      %v1252 = vadd.f32 0.0, %v1251
      %v1253 = vpop.f32.mrb[0].mxu0
      %1254 = vmatprep.mubr.f32.mxu0 %v817
      %1255 = vmatmul.mubr.f32.gmra.mrb[0].mxu0 %v816
      %v1256 = vpop.f32.mrb[0].mxu0
      %v1257 = vadd.f32 0.0, %v1256
      %v1258 = vpop.f32.mrb[0].mxu0
      %1259 = vmatprep.mubr.f32.mxu0 %v819
      %1260 = vmatmul.mubr.f32.gmra.mrb[0].mxu0 %v818
      %v1261 = vpop.f32.mrb[0].mxu0
      %v1262 = vadd.f32 0.0, %v1261
      %v1263 = vpop.f32.mrb[0].mxu0
      %1264 = vmatprep.mubr.f32.mxu0 %v821
      %1265 = vmatmul.mubr.f32.gmra.mrb[0].mxu0 %v820
      %v1266 = vpop.f32.mrb[0].mxu0
      %v1267 = vadd.f32 0.0, %v1266
      %v1268 = vpop.f32.mrb[0].mxu0
      %1269 = vmatprep.mubr.f32.mxu0 %v823
      %1270 = vmatmul.mubr.f32.gmra.mrb[0].mxu0 %v822
      %v1271 = vpop.f32.mrb[0].mxu0
      %v1272 = vadd.f32 0.0, %v1271
      %v1273 = vpop.f32.mrb[0].mxu0
      %1274 = vmatprep.mubr.f32.mxu0 %v825
      %1275 = vmatmul.mubr.f32.gmra.mrb[0].mxu0 %v824
      %v1276 = vpop.f32.mrb[0].mxu0
      %v1277 = vadd.f32 0.0, %v1276
      %v1278 = vpop.f32.mrb[0].mxu0
      %1279 = vmatprep.mubr.f32.mxu0 %v827
      %1280 = vmatmul.mubr.f32.gmra.mrb[0].mxu0 %v826
      %v1281 = vpop.f32.mrb[0].mxu0
      %v1282 = vadd.f32 0.0, %v1281
      %v1283 = vpop.f32.mrb[0].mxu0
      %1284 = vmatprep.mubr.f32.mxu0 %v829
      %1285 = vmatmul.mubr.f32.gmra.mrb[0].mxu0 %v828
      %v1286 = vpop.f32.mrb[0].mxu0
      %v1287 = vadd.f32 0.0, %v1286
      %v1288 = vpop.f32.mrb[0].mxu0
      %1289 = vmatprep.mubr.f32.mxu0 %v831
      %1290 = vmatmul.mubr.f32.gmra.mrb[0].mxu0 %v830
      %v1291 = vpop.f32.mrb[0].mxu0
      %v1292 = vadd.f32 0.0, %v1291
      %v1293 = vpop.f32.mrb[0].mxu0
      %1294 = vmatprep.mubr.f32.mxu0 %v833
      %1295 = vmatmul.mubr.f32.gmra.mrb[0].mxu0 %v832
      %v1296 = vpop.f32.mrb[0].mxu0
      %v1297 = vadd.f32 0.0, %v1296
      %v1298 = vpop.f32.mrb[0].mxu0
      %1299 = vmatprep.mubr.f32.mxu0 %v835
      %1300 = vmatmul.mubr.f32.gmra.mrb[0].mxu0 %v834
      %v1301 = vpop.f32.mrb[0].mxu0
      %v1302 = vadd.f32 0.0, %v1301
      %v1303 = vpop.f32.mrb[0].mxu0
      %1304 = vmatprep.mubr.f32.mxu0 %v837
      %1305 = vmatmul.mubr.f32.gmra.mrb[0].mxu0 %v836
      %v1306 = vpop.f32.mrb[0].mxu0
      %v1307 = vadd.f32 0.0, %v1306
      %v1308 = vpop.f32.mrb[0].mxu0
      %1309 = vmatprep.mubr.f32.mxu0 %v839
      %1310 = vmatmul.mubr.f32.gmra.mrb[0].mxu0 %v838
      %v1311 = vpop.f32.mrb[0].mxu0
      %v1312 = vadd.f32 0.0, %v1311
      %v1313 = vpop.f32.mrb[0].mxu0
      %1314 = vmatprep.mubr.f32.mxu0 %v841
      %1315 = vmatmul.mubr.f32.gmra.mrb[0].mxu0 %v840
      %v1316 = vpop.f32.mrb[0].mxu0
      %v1317 = vadd.f32 0.0, %v1316
      %v1318 = vpop.f32.mrb[0].mxu0
      %1319 = vmatprep.mubr.f32.mxu0 %v843
      %1320 = vmatmul.mubr.f32.gmra.mrb[0].mxu0 %v842
      %v1321 = vpop.f32.mrb[0].mxu0
      %v1322 = vadd.f32 0.0, %v1321
      %v1323 = vpop.f32.mrb[0].mxu0
      %1324 = vmatprep.mubr.f32.mxu0 %v845
      %1325 = vmatmul.mubr.f32.gmra.mrb[0].mxu0 %v844
      %v1326 = vpop.f32.mrb[0].mxu0
      %v1327 = vadd.f32 0.0, %v1326
      %v1328 = vpop.f32.mrb[0].mxu0
      %1329 = vmatprep.mubr.f32.mxu0 %v847
      %1330 = vmatmul.mubr.f32.gmra.mrb[0].mxu0 %v846
      %v1331 = vpop.f32.mrb[0].mxu0
      %v1332 = vadd.f32 0.0, %v1331
      %v1333 = vpop.f32.mrb[0].mxu0
      %1334 = vmatprep.mubr.f32.mxu0 %v849
      %1335 = vmatmul.mubr.f32.gmra.mrb[0].mxu0 %v848
      %v1336 = vpop.f32.mrb[0].mxu0
      %v1337 = vadd.f32 0.0, %v1336
      %v1338 = vpop.f32.mrb[0].mxu0
      %1339 = vmatprep.mubr.f32.mxu0 %v851
      %1340 = vmatmul.mubr.f32.gmra.mrb[0].mxu0 %v850
      %v1341 = vpop.f32.mrb[0].mxu0
      %v1342 = vadd.f32 0.0, %v1341
      %v1343 = vpop.f32.mrb[0].mxu0
      %1344 = vmatprep.mubr.f32.mxu0 %v853
      %1345 = vmatmul.mubr.f32.gmra.mrb[0].mxu0 %v852
      %v1346 = vpop.f32.mrb[0].mxu0
      %v1347 = vadd.f32 0.0, %v1346
      %v1348 = vpop.f32.mrb[0].mxu0
      %1349 = vmatprep.mubr.f32.mxu0 %v855
      %1350 = vmatmul.mubr.f32.gmra.mrb[0].mxu0 %v854
      %v1351 = vpop.f32.mrb[0].mxu0
      %v1352 = vadd.f32 0.0, %v1351
      %v1353 = vpop.f32.mrb[0].mxu0
      %1354 = vmatprep.mubr.f32.mxu0 %v857
      %1355 = vmatmul.mubr.f32.gmra.mrb[0].mxu0 %v856
      %v1356 = vpop.f32.mrb[0].mxu0
      %v1357 = vadd.f32 0.0, %v1356
      %v1358 = vpop.f32.mrb[0].mxu0
      %1359 = vmatprep.mubr.f32.mxu0 %v859
      %1360 = vmatmul.mubr.f32.gmra.mrb[0].mxu0 %v858
      %v1361 = vpop.f32.mrb[0].mxu0
      %v1362 = vadd.f32 0.0, %v1361
      %v1363 = vpop.f32.mrb[0].mxu0
      %1364 = vmatprep.mubr.f32.mxu0 %v861
      %1365 = vmatmul.mubr.f32.gmra.mrb[0].mxu0 %v860
      %v1366 = vpop.f32.mrb[0].mxu0
      %v1367 = vadd.f32 0.0, %v1366
      %v1368 = vpop.f32.mrb[0].mxu0
      %1369 = vmatprep.mubr.f32.mxu0 %v863
      %1370 = vmatmul.mubr.f32.gmra.mrb[0].mxu0 %v862
      %v1371 = vpop.f32.mrb[0].mxu0
      %v1372 = vadd.f32 0.0, %v1371
      %v1373 = vpop.f32.mrb[0].mxu0
      %1374 = vmatprep.mubr.f32.mxu0 %v865
      %1375 = vmatmul.mubr.f32.gmra.mrb[0].mxu0 %v864
      %v1376 = vpop.f32.mrb[0].mxu0
      %v1377 = vadd.f32 0.0, %v1376
      %v1378 = vpop.f32.mrb[0].mxu0
      %1379 = vdwg.mxu0
      %v1380 = vmul.f32 %v965, %v1222
      %v1381 = vmul.f32 %v970, %v1227
      %v1382 = vmul.f32 %v975, %v1232
      %v1383 = vmul.f32 %v980, %v1237
      %v1384 = vmul.f32 %v985, %v1242
      %v1385 = vmul.f32 %v990, %v1247
      %v1386 = vmul.f32 %v995, %v1252
      %v1387 = vmul.f32 %v1000, %v1257
      %v1388 = vmul.f32 %v1005, %v1262
      %v1389 = vmul.f32 %v1010, %v1267
      %v1390 = vmul.f32 %v1015, %v1272
      %v1391 = vmul.f32 %v1020, %v1277
      %v1392 = vmul.f32 %v1025, %v1282
      %v1393 = vmul.f32 %v1030, %v1287
      %v1394 = vmul.f32 %v1035, %v1292
      %v1395 = vmul.f32 %v1040, %v1297
      %v1396 = vmul.f32 %v1045, %v1302
      %v1397 = vmul.f32 %v1050, %v1307
      %v1398 = vmul.f32 %v1055, %v1312
      %v1399 = vmul.f32 %v1060, %v1317
      %v1400 = vmul.f32 %v1065, %v1322
      %v1401 = vmul.f32 %v1070, %v1327
      %v1402 = vmul.f32 %v1075, %v1332
      %v1403 = vmul.f32 %v1080, %v1337
      %v1404 = vmul.f32 %v1085, %v1342
      %v1405 = vmul.f32 %v1090, %v1347
      %v1406 = vmul.f32 %v1095, %v1352
      %v1407 = vmul.f32 %v1100, %v1357
      %v1408 = vmul.f32 %v1105, %v1362
      %v1409 = vmul.f32 %v1110, %v1367
      %v1410 = vmul.f32 %v1115, %v1372
      %v1411 = vmul.f32 %v1120, %v1377
      %vm1412 = vcmask 523264
      %v1413 = vsel %vm1412, %v1380, 0.0
      %1414 = vadd.xlane.f32.xlu0 %v1413
      %v1415 = vpop.xlane.xlu0 %1414
      %v1416 = vsel %vm1412, %v1381, 0.0
      %1417 = vadd.xlane.f32.xlu0 %v1416
      %v1418 = vpop.xlane.xlu0 %1417
      %v1419 = vsel %vm1412, %v1382, 0.0
      %1420 = vadd.xlane.f32.xlu0 %v1419
      %v1421 = vpop.xlane.xlu0 %1420
      %v1422 = vsel %vm1412, %v1383, 0.0
      %1423 = vadd.xlane.f32.xlu0 %v1422
      %v1424 = vpop.xlane.xlu0 %1423
      %v1425 = vsel %vm1412, %v1384, 0.0
      %1426 = vadd.xlane.f32.xlu0 %v1425
      %v1427 = vpop.xlane.xlu0 %1426
      %v1428 = vsel %vm1412, %v1385, 0.0
      %1429 = vadd.xlane.f32.xlu0 %v1428
      %v1430 = vpop.xlane.xlu0 %1429
      %v1431 = vsel %vm1412, %v1386, 0.0
      %1432 = vadd.xlane.f32.xlu0 %v1431
      %v1433 = vpop.xlane.xlu0 %1432
      %v1434 = vsel %vm1412, %v1387, 0.0
      %1435 = vadd.xlane.f32.xlu0 %v1434
      %v1436 = vpop.xlane.xlu0 %1435
      %v1437 = vsel %vm1412, %v1388, 0.0
      %1438 = vadd.xlane.f32.xlu0 %v1437
      %v1439 = vpop.xlane.xlu0 %1438
      %v1440 = vsel %vm1412, %v1389, 0.0
      %1441 = vadd.xlane.f32.xlu0 %v1440
      %v1442 = vpop.xlane.xlu0 %1441
      %v1443 = vsel %vm1412, %v1390, 0.0
      %1444 = vadd.xlane.f32.xlu0 %v1443
      %v1445 = vpop.xlane.xlu0 %1444
      %v1446 = vsel %vm1412, %v1391, 0.0
      %1447 = vadd.xlane.f32.xlu0 %v1446
      %v1448 = vpop.xlane.xlu0 %1447
      %v1449 = vsel %vm1412, %v1392, 0.0
      %1450 = vadd.xlane.f32.xlu0 %v1449
      %v1451 = vpop.xlane.xlu0 %1450
      %v1452 = vsel %vm1412, %v1393, 0.0
      %1453 = vadd.xlane.f32.xlu0 %v1452
      %v1454 = vpop.xlane.xlu0 %1453
      %v1455 = vsel %vm1412, %v1394, 0.0
      %1456 = vadd.xlane.f32.xlu0 %v1455
      %v1457 = vpop.xlane.xlu0 %1456
      %v1458 = vsel %vm1412, %v1395, 0.0
      %1459 = vadd.xlane.f32.xlu0 %v1458
      %v1460 = vpop.xlane.xlu0 %1459
      %v1461 = vsel %vm1412, %v1396, 0.0
      %1462 = vadd.xlane.f32.xlu0 %v1461
      %v1463 = vpop.xlane.xlu0 %1462
      %v1464 = vsel %vm1412, %v1397, 0.0
      %1465 = vadd.xlane.f32.xlu0 %v1464
      %v1466 = vpop.xlane.xlu0 %1465
      %v1467 = vsel %vm1412, %v1398, 0.0
      %1468 = vadd.xlane.f32.xlu0 %v1467
      %v1469 = vpop.xlane.xlu0 %1468
      %v1470 = vsel %vm1412, %v1399, 0.0
      %1471 = vadd.xlane.f32.xlu0 %v1470
      %v1472 = vpop.xlane.xlu0 %1471
      %v1473 = vsel %vm1412, %v1400, 0.0
      %1474 = vadd.xlane.f32.xlu0 %v1473
      %v1475 = vpop.xlane.xlu0 %1474
      %v1476 = vsel %vm1412, %v1401, 0.0
      %1477 = vadd.xlane.f32.xlu0 %v1476
      %v1478 = vpop.xlane.xlu0 %1477
      %v1479 = vsel %vm1412, %v1402, 0.0
      %1480 = vadd.xlane.f32.xlu0 %v1479
      %v1481 = vpop.xlane.xlu0 %1480
      %v1482 = vsel %vm1412, %v1403, 0.0
      %1483 = vadd.xlane.f32.xlu0 %v1482
      %v1484 = vpop.xlane.xlu0 %1483
      %v1485 = vsel %vm1412, %v1404, 0.0
      %1486 = vadd.xlane.f32.xlu0 %v1485
      %v1487 = vpop.xlane.xlu0 %1486
      %v1488 = vsel %vm1412, %v1405, 0.0
      %1489 = vadd.xlane.f32.xlu0 %v1488
      %v1490 = vpop.xlane.xlu0 %1489
      %v1491 = vsel %vm1412, %v1406, 0.0
      %1492 = vadd.xlane.f32.xlu0 %v1491
      %v1493 = vpop.xlane.xlu0 %1492
      %v1494 = vsel %vm1412, %v1407, 0.0
      %1495 = vadd.xlane.f32.xlu0 %v1494
      %v1496 = vpop.xlane.xlu0 %1495
      %v1497 = vsel %vm1412, %v1408, 0.0
      %1498 = vadd.xlane.f32.xlu0 %v1497
      %v1499 = vpop.xlane.xlu0 %1498
      %v1500 = vsel %vm1412, %v1409, 0.0
      %1501 = vadd.xlane.f32.xlu0 %v1500
      %v1502 = vpop.xlane.xlu0 %1501
      %v1503 = vsel %vm1412, %v1410, 0.0
      %1504 = vadd.xlane.f32.xlu0 %v1503
      %v1505 = vpop.xlane.xlu0 %1504
      %v1506 = vsel %vm1412, %v1411, 0.0
      %1507 = vadd.xlane.f32.xlu0 %v1506
      %v1508 = vpop.xlane.xlu0 %1507
      %vm1509 = vcmask 7168
      %1510 = vst.msk [vmem:[%s221] sm:$0xff] %vm1509, %v1415
      %1511 = vst.msk [vmem:[%s221 + $0x8] sm:$0xff] %vm1509, %v1418
      %1512 = vst.msk [vmem:[%s221 + $0x10] sm:$0xff] %vm1509, %v1421
      %1513 = vst.msk [vmem:[%s221 + $0x18] sm:$0xff] %vm1509, %v1424
      %1514 = vst.msk [vmem:[%s221 + $0x20] sm:$0xff] %vm1509, %v1427
      %1515 = vst.msk [vmem:[%s221 + $0x28] sm:$0xff] %vm1509, %v1430
      %1516 = vst.msk [vmem:[%s221 + $0x30] sm:$0xff] %vm1509, %v1433
      %1517 = vst.msk [vmem:[%s221 + $0x38] sm:$0xff] %vm1509, %v1436
      %1518 = vst.msk [vmem:[%s221 + $0x40] sm:$0xff] %vm1509, %v1439
      %1519 = vst.msk [vmem:[%s221 + $0x48] sm:$0xff] %vm1509, %v1442
      %1520 = vst.msk [vmem:[%s221 + $0x50] sm:$0xff] %vm1509, %v1445
      %1521 = vst.msk [vmem:[%s221 + $0x58] sm:$0xff] %vm1509, %v1448
      %1522 = vst.msk [vmem:[%s221 + $0x60] sm:$0xff] %vm1509, %v1451
      %1523 = vst.msk [vmem:[%s221 + $0x68] sm:$0xff] %vm1509, %v1454
      %1524 = vst.msk [vmem:[%s221 + $0x70] sm:$0xff] %vm1509, %v1457
      %1525 = vst.msk [vmem:[%s221 + $0x78] sm:$0xff] %vm1509, %v1460
      %1526 = vst.msk [vmem:[%s221 + $0x80] sm:$0xff] %vm1509, %v1463
      %1527 = vst.msk [vmem:[%s221 + $0x88] sm:$0xff] %vm1509, %v1466
      %1528 = vst.msk [vmem:[%s221 + $0x90] sm:$0xff] %vm1509, %v1469
      %1529 = vst.msk [vmem:[%s221 + $0x98] sm:$0xff] %vm1509, %v1472
      %1530 = vst.msk [vmem:[%s221 + $0xa0] sm:$0xff] %vm1509, %v1475
      %1531 = vst.msk [vmem:[%s221 + $0xa8] sm:$0xff] %vm1509, %v1478
      %1532 = vst.msk [vmem:[%s221 + $0xb0] sm:$0xff] %vm1509, %v1481
      %1533 = vst.msk [vmem:[%s221 + $0xb8] sm:$0xff] %vm1509, %v1484
      %1534 = vst.msk [vmem:[%s221 + $0xc0] sm:$0xff] %vm1509, %v1487
      %1535 = vst.msk [vmem:[%s221 + $0xc8] sm:$0xff] %vm1509, %v1490
      %1536 = vst.msk [vmem:[%s221 + $0xd0] sm:$0xff] %vm1509, %v1493
      %1537 = vst.msk [vmem:[%s221 + $0xd8] sm:$0xff] %vm1509, %v1496
      %1538 = vst.msk [vmem:[%s221 + $0xe0] sm:$0xff] %vm1509, %v1499
      %1539 = vst.msk [vmem:[%s221 + $0xe8] sm:$0xff] %vm1509, %v1502
      %1540 = vst.msk [vmem:[%s221 + $0xf0] sm:$0xff] %vm1509, %v1505
      %1541 = vst.msk [vmem:[%s221 + $0xf8] sm:$0xff] %vm1509, %v1508
      %s1542 = smul.u32 32, %s15
      %p1543 = scmp.lt.s32.totalorder %s1542, 63
      %s1544 = scalar_select %p1543, %s1542, 63
      %s1545 = smul.addr %s1544, 8
      %s1546 = scalar_lea.vmem %s4, %s1545
      // Predicated region
      $region37: #{tpu_custom_call.1} parent=35 // pred_check
        %p1547 = pneg %p127
      $region38: #{tpu_custom_call.1} parent=35 // pred_check_branch
        %1549 = sbr.rel (%p1547) target = $region40
      $region39: #{tpu_custom_call.1} parent=35 // pred_region
        %s1550 = smul.u32 32, %s15
      $region40: #{tpu_custom_call.1} parent=35 // pred_fallthru
        _
    $region36: #{tpu_custom_call.1} parent=5 // pred_fallthru
      _
    %p1551 = scmp.le.s32.totalorder 2, %s10
    // Predicated region
    $region41: #{tpu_custom_call.1} parent=5 // pred_check
      %p1552 = pneg %p1551
    $region42: #{tpu_custom_call.1} parent=5 // pred_check_branch
      %1554 = sbr.rel (%p1552) target = $region44
    $region43: #{tpu_custom_call.1} parent=5 // pred_region
      %s1555 = ssub.s32 %s10, 2
      // Predicated region
      $region45: #{tpu_custom_call.1} parent=43 // pred_check
        %p1556 = pneg %p133
      $region46: #{tpu_custom_call.1} parent=43 // pred_check_branch
        %1558 = sbr.rel (%p1556) target = $region48
      $region47: #{tpu_custom_call.1} parent=43 // pred_region
        %s1559 = smul.u32 32, %s16
        %p1560 = scmp.lt.s32.totalorder %s1559, 63
        %s1561 = scalar_select %p1560, %s1559, 63
        %s1562 = smul.addr %s1561, 8
        %s1563 = scalar_lea.vmem %s4, %s1562
      $region48: #{tpu_custom_call.1} parent=43 // pred_fallthru
        _
    $region44: #{tpu_custom_call.1} parent=5 // pred_fallthru
      _
  $region6: #{tpu_custom_call.1} parent=0 // loop_footer
    %s14 = sadd.s32 1, %s10
  $region7: #{tpu_custom_call.1} parent=0 // loop_footer_branch
    %9 = sbr.rel target = $region3
  $region8: #{tpu_custom_call.1} parent=0 // loop_exit
    _

</llo_original>
